<compile_context>
chip_gen: v7x
topology: tpu7x:2x2x1
jax: 0.10.0
libtpu: 0.0.40
codegen_flags: <defaults>
</compile_context>

<pallas_src>
import functools

import jax
import jax.numpy as jnp
from jax.experimental import pallas as pl
from jax.experimental.pallas import tpu as pltpu

HIDDEN = 128


def qnet_kernel(x_ref, w1_ref, b1_ref, w2_ref, b2_ref, w3_ref, b3_ref, o_ref,
                *, compute_dtype):
    # Entire 3-layer MLP for one (TB, state_dim) batch tile, fused in VMEM:
    # three MXU matmuls with f32 accumulation; bias-add + ReLU in f32 on VPU.
    # Full f32 precision for the f32 operand path; default for bf16 operands.
    prec = jax.lax.Precision.HIGHEST if compute_dtype == jnp.float32 else None

    x = x_ref[...].astype(compute_dtype)
    h1 = jnp.dot(x, w1_ref[...], preferred_element_type=jnp.float32,
                 precision=prec) + b1_ref[...]
    h1 = jnp.maximum(h1, 0.0).astype(compute_dtype)
    h2 = jnp.dot(h1, w2_ref[...], preferred_element_type=jnp.float32,
                 precision=prec) + b2_ref[...]
    h2 = jnp.maximum(h2, 0.0).astype(compute_dtype)
    o_ref[...] = (
        jnp.dot(h2, w3_ref[...], preferred_element_type=jnp.float32,
                precision=prec) + b3_ref[...]
    ).astype(o_ref.dtype)


def _round_up(n, m):
    return -(-n // m) * m


@functools.partial(jax.jit, static_argnames=("block_b", "compute_dtype"))
def qnetwork_forward(x, params, *, block_b=512, compute_dtype=jnp.float32):
    """x: [B, state_dim] float32. params: dict of w1,b1,w2,b2,w3,b3 (f32).

    compute_dtype: dtype of the matmul operands (jnp.float32 or jnp.bfloat16;
    bf16 recommended on v6e/v7x). Accumulation, bias-add and ReLU are always
    f32. Output is f32 [B, action_dim].
    """
    w1, b1, w2, b2, w3, b3 = (
        params["w1"], params["b1"], params["w2"],
        params["b2"], params["w3"], params["b3"],
    )
    B, state_dim = x.shape
    hidden = w1.shape[1]
    action_dim = w3.shape[1]

    # --- batch tiling: the only padding; feature dims stay unpadded ---
    MIN_SPLIT = 256  # split a lone tile this big in two -> feeds both v7x TCs
    b_p = _round_up(max(B, 1), 8)
    if b_p <= block_b:
        tb = b_p // 2 if (b_p >= MIN_SPLIT and b_p % 16 == 0) else b_p
    else:
        tb = block_b
        b_p = _round_up(B, tb)
    grid = (b_p // tb,)

    x_in = x if b_p == B else jnp.pad(x, ((0, b_p - B), (0, 0)))

    # Weights are ~70 KB: cast once in the wrapper. x is cast per-tile inside
    # the kernel, so no padded/cast HBM copy of x is ever materialized.
    w1c, w2c, w3c = (w.astype(compute_dtype) for w in (w1, w2, w3))
    b1c, b2c, b3c = (b.astype(jnp.float32) for b in (b1, b2, b3))

    # Weights/biases: index_map is constant -> VMEM-resident across grid steps.
    resident = lambda a: pl.BlockSpec(a.shape, lambda i: (0, 0))

    flops = 2 * b_p * (state_dim * hidden + hidden * hidden + hidden * action_dim)
    bytes_accessed = (
        x_in.size * x_in.dtype.itemsize
        + sum(a.size * a.dtype.itemsize
              for a in (w1c, b1c, w2c, b2c, w3c, b3c))
        + b_p * action_dim * 4
    )

    out = pl.pallas_call(
        functools.partial(qnet_kernel, compute_dtype=compute_dtype),
        out_shape=jax.ShapeDtypeStruct((b_p, action_dim), jnp.float32),
        grid=grid,
        in_specs=[
            pl.BlockSpec((tb, state_dim), lambda i: (i, 0)),  # x tile (K unpadded)
            resident(w1c), resident(b1c),
            resident(w2c), resident(b2c),
            resident(w3c), resident(b3c),
        ],
        out_specs=pl.BlockSpec((tb, action_dim), lambda i: (i, 0)),
        compiler_params=pltpu.CompilerParams(
            dimension_semantics=("parallel",),   # megacore sharding on v7x
        ),
        cost_estimate=pl.CostEstimate(
            flops=flops, transcendentals=0, bytes_accessed=bytes_accessed),
    )(x_in, w1c, b1c, w2c, b2c, w3c, b3c)

    return out[:B] if b_p != B else out


def init_qnetwork_params(key, state_dim, action_dim, hidden=HIDDEN):
    """Deterministic init mimicking nn.Linear's Kaiming-uniform defaults."""
    keys = jax.random.split(key, 6)

    def linear_init(kw, kb, fan_in, fan_out):
        bound = 1.0 / jnp.sqrt(fan_in)
        w = jax.random.uniform(kw, (fan_in, fan_out), jnp.float32, -bound, bound)
        b = jax.random.uniform(kb, (1, fan_out), jnp.float32, -bound, bound)
        return w, b

    w1, b1 = linear_init(keys[0], keys[1], state_dim, hidden)
    w2, b2 = linear_init(keys[2], keys[3], hidden, hidden)
    w3, b3 = linear_init(keys[4], keys[5], hidden, action_dim)
    return {"w1": w1, "b1": b1, "w2": w2, "b2": b2, "w3": w3, "b3": b3}


def qnetwork_ref(x, p):
    prec = jax.lax.Precision.HIGHEST
    h1 = jnp.maximum(jnp.dot(x, p["w1"], precision=prec) + p["b1"], 0.0)
    h2 = jnp.maximum(jnp.dot(h1, p["w2"], precision=prec) + p["b2"], 0.0)
    return jnp.dot(h2, p["w3"], precision=prec) + p["b3"]


if __name__ == "__main__":
    state_dim, action_dim, batch = 8, 4, 2

    key = jax.random.PRNGKey(0)
    key_params, key_x, key_xl = jax.random.split(key, 3)
    params = init_qnetwork_params(key_params, state_dim, action_dim)

    # Small batch (spec shape): single-tile path, f32 operands.
    x = jax.random.normal(key_x, (batch, state_dim), dtype=jnp.float32)
    out = jax.block_until_ready(qnetwork_forward(x, params))
    ref = qnetwork_ref(x, params)
    assert out.shape == (batch, action_dim)
    assert jnp.allclose(out, ref, atol=1e-4, rtol=1e-4)

    # Larger, non-multiple batch: exercises batch padding + 2-step grid split.
    xl = jax.random.normal(key_xl, (300, state_dim), dtype=jnp.float32)
    out_l = jax.block_until_ready(qnetwork_forward(xl, params))
    ref_l = qnetwork_ref(xl, params)
    assert out_l.shape == (300, action_dim)
    assert jnp.allclose(out_l, ref_l, atol=1e-4, rtol=1e-4)

    # bf16-operand fast path (recommended on v6e/v7x, fine on v5e): f32 accum.
    out_bf16 = jax.block_until_ready(
        qnetwork_forward(xl, params, compute_dtype=jnp.bfloat16)
    )
    assert out_bf16.shape == (300, action_dim)
    assert jnp.allclose(out_bf16, ref_l, atol=3e-2, rtol=3e-2)

    print("KERNEL_OK")
</pallas_src>

<mosaic_0001>
module attributes {stable_mosaic.version = 11 : i64} {
  func.func @qnet_kernel(%arg0: i32, %arg1: memref<8x8xf32, #tpu.memory_space<vmem>>, %arg2: memref<8x128xf32, #tpu.memory_space<vmem>>, %arg3: memref<1x128xf32, #tpu.memory_space<vmem>>, %arg4: memref<128x128xf32, #tpu.memory_space<vmem>>, %arg5: memref<1x128xf32, #tpu.memory_space<vmem>>, %arg6: memref<128x4xf32, #tpu.memory_space<vmem>>, %arg7: memref<1x4xf32, #tpu.memory_space<vmem>>, %arg8: memref<8x4xf32, #tpu.memory_space<vmem>>) attributes {dimension_semantics = [#tpu.dimension_semantics<parallel>], iteration_bounds = array<i64: 1>, scalar_prefetch = 0 : i64, scratch_operands = 0 : i64, tpu.core_type = #tpu.core_type<tc>, window_params = [{transform_indices = @transform_0, window_bounds = array<i64: 8, 8>}, {pipeline_mode = #tpu.pipeline_mode<synchronous>, transform_indices = @transform_1, window_bounds = array<i64: 8, 128>}, {pipeline_mode = #tpu.pipeline_mode<synchronous>, transform_indices = @transform_2, window_bounds = array<i64: 1, 128>}, {pipeline_mode = #tpu.pipeline_mode<synchronous>, transform_indices = @transform_3, window_bounds = array<i64: 128, 128>}, {pipeline_mode = #tpu.pipeline_mode<synchronous>, transform_indices = @transform_4, window_bounds = array<i64: 1, 128>}, {pipeline_mode = #tpu.pipeline_mode<synchronous>, transform_indices = @transform_5, window_bounds = array<i64: 128, 4>}, {pipeline_mode = #tpu.pipeline_mode<synchronous>, transform_indices = @transform_6, window_bounds = array<i64: 1, 4>}, {transform_indices = @transform_7, window_bounds = array<i64: 8, 4>}]} {
    %c0 = arith.constant 0 : index
    %c0_0 = arith.constant 0 : index
    %0 = vector.load %arg1[%c0, %c0_0] : memref<8x8xf32, #tpu.memory_space<vmem>>, vector<8x8xf32>
    %c0_1 = arith.constant 0 : index
    %c0_2 = arith.constant 0 : index
    %1 = vector.load %arg2[%c0_1, %c0_2] : memref<8x128xf32, #tpu.memory_space<vmem>>, vector<8x128xf32>
    %cst = arith.constant dense<0.000000e+00> : vector<8x128xf32>
    %2 = tpu.matmul %0, %1, %cst {dimension_numbers = #tpu.dot_dimension_numbers<[1], [0], [0], [1], [0, 0, 1, 1], [], []>, precision = #tpu.contract_precision<fp32>} : vector<8x8xf32>, vector<8x128xf32>, vector<8x128xf32> -> vector<8x128xf32>
    %c0_3 = arith.constant 0 : index
    %c0_4 = arith.constant 0 : index
    %3 = vector.load %arg3[%c0_3, %c0_4] : memref<1x128xf32, #tpu.memory_space<vmem>>, vector<1x128xf32>
    %4 = vector.broadcast %3 : vector<1x128xf32> to vector<8x128xf32>
    %5 = arith.addf %2, %4 : vector<8x128xf32>
    %cst_5 = arith.constant 0.000000e+00 : f32
    %6 = vector.broadcast %cst_5 : f32 to vector<8x128xf32>
    %7 = arith.maximumf %5, %6 : vector<8x128xf32>
    %c0_6 = arith.constant 0 : index
    %c0_7 = arith.constant 0 : index
    %8 = vector.load %arg4[%c0_6, %c0_7] : memref<128x128xf32, #tpu.memory_space<vmem>>, vector<128x128xf32>
    %cst_8 = arith.constant dense<0.000000e+00> : vector<8x128xf32>
    %9 = tpu.matmul %7, %8, %cst_8 {dimension_numbers = #tpu.dot_dimension_numbers<[1], [0], [0], [1], [0, 0, 1, 1], [], []>, precision = #tpu.contract_precision<fp32>} : vector<8x128xf32>, vector<128x128xf32>, vector<8x128xf32> -> vector<8x128xf32>
    %c0_9 = arith.constant 0 : index
    %c0_10 = arith.constant 0 : index
    %10 = vector.load %arg5[%c0_9, %c0_10] : memref<1x128xf32, #tpu.memory_space<vmem>>, vector<1x128xf32>
    %11 = vector.broadcast %10 : vector<1x128xf32> to vector<8x128xf32>
    %12 = arith.addf %9, %11 : vector<8x128xf32>
    %cst_11 = arith.constant 0.000000e+00 : f32
    %13 = vector.broadcast %cst_11 : f32 to vector<8x128xf32>
    %14 = arith.maximumf %12, %13 : vector<8x128xf32>
    %c0_12 = arith.constant 0 : index
    %c0_13 = arith.constant 0 : index
    %15 = vector.load %arg6[%c0_12, %c0_13] : memref<128x4xf32, #tpu.memory_space<vmem>>, vector<128x4xf32>
    %cst_14 = arith.constant dense<0.000000e+00> : vector<8x4xf32>
    %16 = tpu.matmul %14, %15, %cst_14 {dimension_numbers = #tpu.dot_dimension_numbers<[1], [0], [0], [1], [0, 0, 1, 1], [], []>, precision = #tpu.contract_precision<fp32>} : vector<8x128xf32>, vector<128x4xf32>, vector<8x4xf32> -> vector<8x4xf32>
    %c0_15 = arith.constant 0 : index
    %c0_16 = arith.constant 0 : index
    %17 = vector.load %arg7[%c0_15, %c0_16] : memref<1x4xf32, #tpu.memory_space<vmem>>, vector<1x4xf32>
    %18 = vector.broadcast %17 : vector<1x4xf32> to vector<8x4xf32>
    %19 = arith.addf %16, %18 : vector<8x4xf32>
    %c0_17 = arith.constant 0 : index
    %c0_18 = arith.constant 0 : index
    %20 = vector.load %arg8[%c0_17, %c0_18] : memref<8x4xf32, #tpu.memory_space<vmem>>, vector<8x4xf32>
    tpu.vector_store %arg8[%c0_17, %c0_18], %19 {strides = array<i32>} : memref<8x4xf32, #tpu.memory_space<vmem>>, vector<8x4xf32>,
    return
  }
  func.func @transform_0(%arg0: i32) -> (i32, i32) {
    %c0_i32 = arith.constant 0 : i32
    %c0_i32_0 = arith.constant 0 : i32
    return %arg0, %c0_i32 : i32, i32
  }
  func.func @transform_1(%arg0: i32) -> (i32, i32) {
    %c0_i32 = arith.constant 0 : i32
    %c0_i32_0 = arith.constant 0 : i32
    %c0_i32_1 = arith.constant 0 : i32
    return %c0_i32, %c0_i32_0 : i32, i32
  }
  func.func @transform_2(%arg0: i32) -> (i32, i32) {
    %c0_i32 = arith.constant 0 : i32
    %c0_i32_0 = arith.constant 0 : i32
    %c0_i32_1 = arith.constant 0 : i32
    return %c0_i32, %c0_i32_0 : i32, i32
  }
  func.func @transform_3(%arg0: i32) -> (i32, i32) {
    %c0_i32 = arith.constant 0 : i32
    %c0_i32_0 = arith.constant 0 : i32
    %c0_i32_1 = arith.constant 0 : i32
    return %c0_i32, %c0_i32_0 : i32, i32
  }
  func.func @transform_4(%arg0: i32) -> (i32, i32) {
    %c0_i32 = arith.constant 0 : i32
    %c0_i32_0 = arith.constant 0 : i32
    %c0_i32_1 = arith.constant 0 : i32
    return %c0_i32, %c0_i32_0 : i32, i32
  }
  func.func @transform_5(%arg0: i32) -> (i32, i32) {
    %c0_i32 = arith.constant 0 : i32
    %c0_i32_0 = arith.constant 0 : i32
    %c0_i32_1 = arith.constant 0 : i32
    return %c0_i32, %c0_i32_0 : i32, i32
  }
  func.func @transform_6(%arg0: i32) -> (i32, i32) {
    %c0_i32 = arith.constant 0 : i32
    %c0_i32_0 = arith.constant 0 : i32
    %c0_i32_1 = arith.constant 0 : i32
    return %c0_i32, %c0_i32_0 : i32, i32
  }
  func.func @transform_7(%arg0: i32) -> (i32, i32) {
    %c0_i32 = arith.constant 0 : i32
    %c0_i32_0 = arith.constant 0 : i32
    return %arg0, %c0_i32 : i32, i32
  }
}

</mosaic_0001>

<llo_original>
// kernel: qnetwork_forward.1
$region0: #{qnetwork_forward.1}
  #allocation0 [shape = 'u32[]', space=smem, size = 0x4, offset = 0x4, fixed_abs, tag = 'smem constant byte address 0x4 - core index']
  #allocation1 [shape = 'u32[144,128]{1,0:T(1,128)}', space=vmem, size = 0x12000, scoped, tag = 'internal scratch']
  %s0 = inlined_call_operand.vmem [shape: f32[8,8], index: 0, kind: input, shape index: {}]
  %s1 = inlined_call_operand.vmem [shape: f32[8,128], index: 1, kind: input, shape index: {}]
  %s2 = inlined_call_operand.vmem [shape: f32[1,128], index: 2, kind: input, shape index: {}]
  %s3 = inlined_call_operand.vmem [shape: f32[128,128], index: 3, kind: input, shape index: {}]
  %s4 = inlined_call_operand.vmem [shape: f32[1,128], index: 4, kind: input, shape index: {}]
  %s5 = inlined_call_operand.vmem [shape: f32[128,4], index: 5, kind: input, shape index: {}]
  %s6 = inlined_call_operand.vmem [shape: f32[1,4], index: 6, kind: input, shape index: {}]
  %s7 = inlined_call_operand.vmem [shape: f32[8,4], index: 7, kind: output, shape index: {}]
  %s8 = sld [smem:[#allocation0]]
  $region38: #{qnetwork_forward.1} parent=0
    _
  %s10 = ssub.s32 1, %s8
  %s11 = scalar_select 0, %s10, %s8
  // Predicated region
  $region2: #{qnetwork_forward.1} parent=0 // pred_check
    _
  $region3: #{qnetwork_forward.1} parent=0 // pred_check_branch
    %13 = sbr.rel (0) target = $region5
  $region4: #{qnetwork_forward.1} parent=0 // pred_region
    _
  $region5: #{qnetwork_forward.1} parent=0 // pred_fallthru
    _
  // Predicated region
  $region6: #{qnetwork_forward.1} parent=0 // pred_check
    _
  $region7: #{qnetwork_forward.1} parent=0 // pred_check_branch
    %15 = sbr.rel (0) target = $region9
  $region8: #{qnetwork_forward.1} parent=0 // pred_region
    _
  $region9: #{qnetwork_forward.1} parent=0 // pred_fallthru
    _
  // Predicated region
  $region10: #{qnetwork_forward.1} parent=0 // pred_check
    _
  $region11: #{qnetwork_forward.1} parent=0 // pred_check_branch
    %17 = sbr.rel (0) target = $region13
  $region12: #{qnetwork_forward.1} parent=0 // pred_region
    _
  $region13: #{qnetwork_forward.1} parent=0 // pred_fallthru
    _
  // Predicated region
  $region14: #{qnetwork_forward.1} parent=0 // pred_check
    _
  $region15: #{qnetwork_forward.1} parent=0 // pred_check_branch
    %19 = sbr.rel (0) target = $region17
  $region16: #{qnetwork_forward.1} parent=0 // pred_region
    _
  $region17: #{qnetwork_forward.1} parent=0 // pred_fallthru
    _
  // Predicated region
  $region18: #{qnetwork_forward.1} parent=0 // pred_check
    _
  $region19: #{qnetwork_forward.1} parent=0 // pred_check_branch
    %21 = sbr.rel (0) target = $region21
  $region20: #{qnetwork_forward.1} parent=0 // pred_region
    _
  $region21: #{qnetwork_forward.1} parent=0 // pred_fallthru
    _
  // Predicated region
  $region22: #{qnetwork_forward.1} parent=0 // pred_check
    _
  $region23: #{qnetwork_forward.1} parent=0 // pred_check_branch
    %23 = sbr.rel (0) target = $region25
  $region24: #{qnetwork_forward.1} parent=0 // pred_region
    _
  $region25: #{qnetwork_forward.1} parent=0 // pred_fallthru
    _
  // Predicated region
  $region26: #{qnetwork_forward.1} parent=0 // pred_check
    _
  $region27: #{qnetwork_forward.1} parent=0 // pred_check_branch
    %25 = sbr.rel (0) target = $region29
  $region28: #{qnetwork_forward.1} parent=0 // pred_region
    _
  $region29: #{qnetwork_forward.1} parent=0 // pred_fallthru
    _
  %v26 = vld [vmem:[%s0] sm:$0xff]
  %v27 = vld [vmem:[%s1] sm:$0xff]
  %v28 = vld [vmem:[%s2] sm:$0x1]
  %v30 = vlaneseq
  %v31 = vshrl.u32 %v30, 7
  %v32 = vsub.s32 0, %v31
  %v33 = vrot.slane %v28, %v32
  %vm35 = vcmask 64512
  %v37 = vsel %vm35, %v26, 0
  %39 = vmatprep.subr.mxu0 0.0
  %v40 = vand.u32 %v27, 4294901760
  %41 = vmatpush1.msra.mxu0 %v40
  %42 = vmatprep.subr.mxu0 0.0
  %43 = vmatpush1.msra.mxu0 0.0
  %44 = vmatprep.subr.mxu0 0.0
  %45 = vmatpush1.msra.mxu0 0.0
  %46 = vmatprep.subr.mxu0 0.0
  %47 = vmatpush1.msra.mxu0 0.0
  %48 = vmatprep.subr.mxu0 0.0
  %49 = vmatpush1.msra.mxu0 0.0
  %50 = vmatprep.subr.mxu0 0.0
  %51 = vmatpush1.msra.mxu0 0.0
  %52 = vmatprep.subr.mxu0 0.0
  %53 = vmatpush1.msra.mxu0 0.0
  %54 = vmatprep.subr.mxu0 0.0
  %55 = vmatpush1.msra.mxu0 0.0
  %56 = vmatprep.subr.mxu0 0.0
  %57 = vmatpush1.msra.mxu0 0.0
  %58 = vmatprep.subr.mxu0 0.0
  %59 = vmatpush1.msra.mxu0 0.0
  %60 = vmatprep.subr.mxu0 0.0
  %61 = vmatpush1.msra.mxu0 0.0
  %62 = vmatprep.subr.mxu0 0.0
  %63 = vmatpush1.msra.mxu0 0.0
  %64 = vmatprep.subr.mxu0 0.0
  %65 = vmatpush1.msra.mxu0 0.0
  %66 = vmatprep.subr.mxu0 0.0
  %67 = vmatpush1.msra.mxu0 0.0
  %68 = vmatprep.subr.mxu0 0.0
  %69 = vmatpush1.msra.mxu0 0.0
  %70 = vmatprep.subr.mxu0 0.0
  %71 = vmatpush1.msra.mxu0 0.0
  %72 = vmatprep.subr.mxu0 0.0
  %73 = vmatpush1.msra.mxu0 0.0
  %74 = vmatprep.subr.mxu0 0.0
  %75 = vmatpush1.msra.mxu0 0.0
  %76 = vmatprep.subr.mxu0 0.0
  %77 = vmatpush1.msra.mxu0 0.0
  %78 = vmatprep.subr.mxu0 0.0
  %79 = vmatpush1.msra.mxu0 0.0
  %80 = vmatprep.subr.mxu0 0.0
  %81 = vmatpush1.msra.mxu0 0.0
  %82 = vmatprep.subr.mxu0 0.0
  %83 = vmatpush1.msra.mxu0 0.0
  %84 = vmatprep.subr.mxu0 0.0
  %85 = vmatpush1.msra.mxu0 0.0
  %86 = vmatprep.subr.mxu0 0.0
  %87 = vmatpush1.msra.mxu0 0.0
  %88 = vmatprep.subr.mxu0 0.0
  %89 = vmatpush1.msra.mxu0 0.0
  %90 = vmatprep.subr.mxu0 0.0
  %91 = vmatpush1.msra.mxu0 0.0
  %92 = vmatprep.subr.mxu0 0.0
  %93 = vmatpush1.msra.mxu0 0.0
  %94 = vmatprep.subr.mxu0 0.0
  %95 = vmatpush1.msra.mxu0 0.0
  %96 = vmatprep.subr.mxu0 0.0
  %97 = vmatpush1.msra.mxu0 0.0
  %98 = vmatprep.subr.mxu0 0.0
  %99 = vmatpush1.msra.mxu0 0.0
  %100 = vmatprep.subr.mxu0 0.0
  %101 = vmatpush1.msra.mxu0 0.0
  %102 = vmatprep.subr.mxu0 0.0
  %103 = vmatpush1.msra.mxu0 0.0
  %104 = vmatprep.mubr.f32.mxu0 0.0
  %v105 = vand.u32 %v37, 4294901760
  %v106 = vsub.f32 %v37, %v105
  %v107 = vand.u32 %v106, 4294901760
  %v108 = vsub.f32 %v106, %v107
  %v109 = vand.u32 %v108, 4294901760
  %110 = vmatmul.mubr.f32.gmra.mrb[0].mxu0 %v109
  %v111 = vpop.f32.mrb[0].mxu0
  %v112 = vadd.f32 %v33, %v111
  %v113 = vpop.f32.mrb[0].mxu0
  %114 = vdwg.mxu0
  %115 = vmatprep.subr.mxu0 0.0
  %v116 = vand.u32 %v27, 4294901760
  %v117 = vsub.f32 %v27, %v116
  %v118 = vand.u32 %v117, 4294901760
  %v119 = vsub.f32 %v117, %v118
  %v120 = vand.u32 %v119, 4294901760
  %121 = vmatpush1.msra.mxu0 %v120
  %122 = vmatprep.subr.mxu0 0.0
  %123 = vmatpush1.msra.mxu0 0.0
  %124 = vmatprep.subr.mxu0 0.0
  %125 = vmatpush1.msra.mxu0 0.0
  %126 = vmatprep.subr.mxu0 0.0
  %127 = vmatpush1.msra.mxu0 0.0
  %128 = vmatprep.subr.mxu0 0.0
  %129 = vmatpush1.msra.mxu0 0.0
  %130 = vmatprep.subr.mxu0 0.0
  %131 = vmatpush1.msra.mxu0 0.0
  %132 = vmatprep.subr.mxu0 0.0
  %133 = vmatpush1.msra.mxu0 0.0
  %134 = vmatprep.subr.mxu0 0.0
  %135 = vmatpush1.msra.mxu0 0.0
  %136 = vmatprep.subr.mxu0 0.0
  %137 = vmatpush1.msra.mxu0 0.0
  %138 = vmatprep.subr.mxu0 0.0
  %139 = vmatpush1.msra.mxu0 0.0
  %140 = vmatprep.subr.mxu0 0.0
  %141 = vmatpush1.msra.mxu0 0.0
  %142 = vmatprep.subr.mxu0 0.0
  %143 = vmatpush1.msra.mxu0 0.0
  %144 = vmatprep.subr.mxu0 0.0
  %145 = vmatpush1.msra.mxu0 0.0
  %146 = vmatprep.subr.mxu0 0.0
  %147 = vmatpush1.msra.mxu0 0.0
  %148 = vmatprep.subr.mxu0 0.0
  %149 = vmatpush1.msra.mxu0 0.0
  %150 = vmatprep.subr.mxu0 0.0
  %151 = vmatpush1.msra.mxu0 0.0
  %152 = vmatprep.subr.mxu0 0.0
  %153 = vmatpush1.msra.mxu0 0.0
  %154 = vmatprep.subr.mxu0 0.0
  %155 = vmatpush1.msra.mxu0 0.0
  %156 = vmatprep.subr.mxu0 0.0
  %157 = vmatpush1.msra.mxu0 0.0
  %158 = vmatprep.subr.mxu0 0.0
  %159 = vmatpush1.msra.mxu0 0.0
  %160 = vmatprep.subr.mxu0 0.0
  %161 = vmatpush1.msra.mxu0 0.0
  %162 = vmatprep.subr.mxu0 0.0
  %163 = vmatpush1.msra.mxu0 0.0
  %164 = vmatprep.subr.mxu0 0.0
  %165 = vmatpush1.msra.mxu0 0.0
  %166 = vmatprep.subr.mxu0 0.0
  %167 = vmatpush1.msra.mxu0 0.0
  %168 = vmatprep.subr.mxu0 0.0
  %169 = vmatpush1.msra.mxu0 0.0
  %170 = vmatprep.subr.mxu0 0.0
  %171 = vmatpush1.msra.mxu0 0.0
  %172 = vmatprep.subr.mxu0 0.0
  %173 = vmatpush1.msra.mxu0 0.0
  %174 = vmatprep.subr.mxu0 0.0
  %175 = vmatpush1.msra.mxu0 0.0
  %176 = vmatprep.subr.mxu0 0.0
  %177 = vmatpush1.msra.mxu0 0.0
  %178 = vmatprep.subr.mxu0 0.0
  %179 = vmatpush1.msra.mxu0 0.0
  %180 = vmatprep.subr.mxu0 0.0
  %181 = vmatpush1.msra.mxu0 0.0
  %182 = vmatprep.subr.mxu0 0.0
  %183 = vmatpush1.msra.mxu0 0.0
  %184 = vmatprep.mubr.f32.mxu0 0.0
  %v185 = vand.u32 %v37, 4294901760
  %186 = vmatmul.mubr.f32.gmra.mrb[0].mxu0 %v185
  %v187 = vpop.f32.mrb[0].mxu0
  %v188 = vadd.f32 %v112, %v187
  %v189 = vpop.f32.mrb[0].mxu0
  %190 = vdwg.mxu0
  %191 = vmatprep.subr.mxu0 0.0
  %v192 = vand.u32 %v27, 4294901760
  %v193 = vsub.f32 %v27, %v192
  %194 = vmatpush1.msra.mxu0 %v193
  %195 = vmatprep.subr.mxu0 0.0
  %196 = vmatpush1.msra.mxu0 0.0
  %197 = vmatprep.subr.mxu0 0.0
  %198 = vmatpush1.msra.mxu0 0.0
  %199 = vmatprep.subr.mxu0 0.0
  %200 = vmatpush1.msra.mxu0 0.0
  %201 = vmatprep.subr.mxu0 0.0
  %202 = vmatpush1.msra.mxu0 0.0
  %203 = vmatprep.subr.mxu0 0.0
  %204 = vmatpush1.msra.mxu0 0.0
  %205 = vmatprep.subr.mxu0 0.0
  %206 = vmatpush1.msra.mxu0 0.0
  %207 = vmatprep.subr.mxu0 0.0
  %208 = vmatpush1.msra.mxu0 0.0
  %209 = vmatprep.subr.mxu0 0.0
  %210 = vmatpush1.msra.mxu0 0.0
  %211 = vmatprep.subr.mxu0 0.0
  %212 = vmatpush1.msra.mxu0 0.0
  %213 = vmatprep.subr.mxu0 0.0
  %214 = vmatpush1.msra.mxu0 0.0
  %215 = vmatprep.subr.mxu0 0.0
  %216 = vmatpush1.msra.mxu0 0.0
  %217 = vmatprep.subr.mxu0 0.0
  %218 = vmatpush1.msra.mxu0 0.0
  %219 = vmatprep.subr.mxu0 0.0
  %220 = vmatpush1.msra.mxu0 0.0
  %221 = vmatprep.subr.mxu0 0.0
  %222 = vmatpush1.msra.mxu0 0.0
  %223 = vmatprep.subr.mxu0 0.0
  %224 = vmatpush1.msra.mxu0 0.0
  %225 = vmatprep.subr.mxu0 0.0
  %226 = vmatpush1.msra.mxu0 0.0
  %227 = vmatprep.subr.mxu0 0.0
  %228 = vmatpush1.msra.mxu0 0.0
  %229 = vmatprep.subr.mxu0 0.0
  %230 = vmatpush1.msra.mxu0 0.0
  %231 = vmatprep.subr.mxu0 0.0
  %232 = vmatpush1.msra.mxu0 0.0
  %233 = vmatprep.subr.mxu0 0.0
  %234 = vmatpush1.msra.mxu0 0.0
  %235 = vmatprep.subr.mxu0 0.0
  %236 = vmatpush1.msra.mxu0 0.0
  %237 = vmatprep.subr.mxu0 0.0
  %238 = vmatpush1.msra.mxu0 0.0
  %239 = vmatprep.subr.mxu0 0.0
  %240 = vmatpush1.msra.mxu0 0.0
  %241 = vmatprep.subr.mxu0 0.0
  %242 = vmatpush1.msra.mxu0 0.0
  %243 = vmatprep.subr.mxu0 0.0
  %244 = vmatpush1.msra.mxu0 0.0
  %245 = vmatprep.subr.mxu0 0.0
  %246 = vmatpush1.msra.mxu0 0.0
  %247 = vmatprep.subr.mxu0 0.0
  %248 = vmatpush1.msra.mxu0 0.0
  %249 = vmatprep.subr.mxu0 0.0
  %250 = vmatpush1.msra.mxu0 0.0
  %251 = vmatprep.subr.mxu0 0.0
  %252 = vmatpush1.msra.mxu0 0.0
  %253 = vmatprep.subr.mxu0 0.0
  %254 = vmatpush1.msra.mxu0 0.0
  %255 = vmatprep.subr.mxu0 0.0
  %256 = vmatpush1.msra.mxu0 0.0
  %257 = vmatprep.mubr.f32.mxu0 0.0
  %v258 = vand.u32 %v37, 4294901760
  %v259 = vsub.f32 %v37, %v258
  %260 = vmatmul.mubr.f32.gmra.mrb[0].mxu0 %v259
  %v261 = vpop.f32.mrb[0].mxu0
  %v262 = vadd.f32 %v188, %v261
  %v263 = vpop.f32.mrb[0].mxu0
  %264 = vdwg.mxu0
  %265 = vmatprep.subr.mxu0 0.0
  %v266 = vand.u32 %v27, 4294901760
  %267 = vmatpush1.msra.mxu0 %v266
  %268 = vmatprep.subr.mxu0 0.0
  %269 = vmatpush1.msra.mxu0 0.0
  %270 = vmatprep.subr.mxu0 0.0
  %271 = vmatpush1.msra.mxu0 0.0
  %272 = vmatprep.subr.mxu0 0.0
  %273 = vmatpush1.msra.mxu0 0.0
  %274 = vmatprep.subr.mxu0 0.0
  %275 = vmatpush1.msra.mxu0 0.0
  %276 = vmatprep.subr.mxu0 0.0
  %277 = vmatpush1.msra.mxu0 0.0
  %278 = vmatprep.subr.mxu0 0.0
  %279 = vmatpush1.msra.mxu0 0.0
  %280 = vmatprep.subr.mxu0 0.0
  %281 = vmatpush1.msra.mxu0 0.0
  %282 = vmatprep.subr.mxu0 0.0
  %283 = vmatpush1.msra.mxu0 0.0
  %284 = vmatprep.subr.mxu0 0.0
  %285 = vmatpush1.msra.mxu0 0.0
  %286 = vmatprep.subr.mxu0 0.0
  %287 = vmatpush1.msra.mxu0 0.0
  %288 = vmatprep.subr.mxu0 0.0
  %289 = vmatpush1.msra.mxu0 0.0
  %290 = vmatprep.subr.mxu0 0.0
  %291 = vmatpush1.msra.mxu0 0.0
  %292 = vmatprep.subr.mxu0 0.0
  %293 = vmatpush1.msra.mxu0 0.0
  %294 = vmatprep.subr.mxu0 0.0
  %295 = vmatpush1.msra.mxu0 0.0
  %296 = vmatprep.subr.mxu0 0.0
  %297 = vmatpush1.msra.mxu0 0.0
  %298 = vmatprep.subr.mxu0 0.0
  %299 = vmatpush1.msra.mxu0 0.0
  %300 = vmatprep.subr.mxu0 0.0
  %301 = vmatpush1.msra.mxu0 0.0
  %302 = vmatprep.subr.mxu0 0.0
  %303 = vmatpush1.msra.mxu0 0.0
  %304 = vmatprep.subr.mxu0 0.0
  %305 = vmatpush1.msra.mxu0 0.0
  %306 = vmatprep.subr.mxu0 0.0
  %307 = vmatpush1.msra.mxu0 0.0
  %308 = vmatprep.subr.mxu0 0.0
  %309 = vmatpush1.msra.mxu0 0.0
  %310 = vmatprep.subr.mxu0 0.0
  %311 = vmatpush1.msra.mxu0 0.0
  %312 = vmatprep.subr.mxu0 0.0
  %313 = vmatpush1.msra.mxu0 0.0
  %314 = vmatprep.subr.mxu0 0.0
  %315 = vmatpush1.msra.mxu0 0.0
  %316 = vmatprep.subr.mxu0 0.0
  %317 = vmatpush1.msra.mxu0 0.0
  %318 = vmatprep.subr.mxu0 0.0
  %319 = vmatpush1.msra.mxu0 0.0
  %320 = vmatprep.subr.mxu0 0.0
  %321 = vmatpush1.msra.mxu0 0.0
  %322 = vmatprep.subr.mxu0 0.0
  %323 = vmatpush1.msra.mxu0 0.0
  %324 = vmatprep.subr.mxu0 0.0
  %325 = vmatpush1.msra.mxu0 0.0
  %326 = vmatprep.subr.mxu0 0.0
  %327 = vmatpush1.msra.mxu0 0.0
  %328 = vmatprep.subr.mxu0 0.0
  %329 = vmatpush1.msra.mxu0 0.0
  %330 = vmatprep.mubr.f32.mxu0 0.0
  %v331 = vand.u32 %v37, 4294901760
  %v332 = vsub.f32 %v37, %v331
  %v333 = vand.u32 %v332, 4294901760
  %334 = vmatmul.mubr.f32.gmra.mrb[0].mxu0 %v333
  %v335 = vpop.f32.mrb[0].mxu0
  %v336 = vadd.f32 %v262, %v335
  %v337 = vpop.f32.mrb[0].mxu0
  %338 = vdwg.mxu0
  %339 = vmatprep.subr.mxu0 0.0
  %v340 = vand.u32 %v27, 4294901760
  %v341 = vsub.f32 %v27, %v340
  %v342 = vand.u32 %v341, 4294901760
  %343 = vmatpush1.msra.mxu0 %v342
  %344 = vmatprep.subr.mxu0 0.0
  %345 = vmatpush1.msra.mxu0 0.0
  %346 = vmatprep.subr.mxu0 0.0
  %347 = vmatpush1.msra.mxu0 0.0
  %348 = vmatprep.subr.mxu0 0.0
  %349 = vmatpush1.msra.mxu0 0.0
  %350 = vmatprep.subr.mxu0 0.0
  %351 = vmatpush1.msra.mxu0 0.0
  %352 = vmatprep.subr.mxu0 0.0
  %353 = vmatpush1.msra.mxu0 0.0
  %354 = vmatprep.subr.mxu0 0.0
  %355 = vmatpush1.msra.mxu0 0.0
  %356 = vmatprep.subr.mxu0 0.0
  %357 = vmatpush1.msra.mxu0 0.0
  %358 = vmatprep.subr.mxu0 0.0
  %359 = vmatpush1.msra.mxu0 0.0
  %360 = vmatprep.subr.mxu0 0.0
  %361 = vmatpush1.msra.mxu0 0.0
  %362 = vmatprep.subr.mxu0 0.0
  %363 = vmatpush1.msra.mxu0 0.0
  %364 = vmatprep.subr.mxu0 0.0
  %365 = vmatpush1.msra.mxu0 0.0
  %366 = vmatprep.subr.mxu0 0.0
  %367 = vmatpush1.msra.mxu0 0.0
  %368 = vmatprep.subr.mxu0 0.0
  %369 = vmatpush1.msra.mxu0 0.0
  %370 = vmatprep.subr.mxu0 0.0
  %371 = vmatpush1.msra.mxu0 0.0
  %372 = vmatprep.subr.mxu0 0.0
  %373 = vmatpush1.msra.mxu0 0.0
  %374 = vmatprep.subr.mxu0 0.0
  %375 = vmatpush1.msra.mxu0 0.0
  %376 = vmatprep.subr.mxu0 0.0
  %377 = vmatpush1.msra.mxu0 0.0
  %378 = vmatprep.subr.mxu0 0.0
  %379 = vmatpush1.msra.mxu0 0.0
  %380 = vmatprep.subr.mxu0 0.0
  %381 = vmatpush1.msra.mxu0 0.0
  %382 = vmatprep.subr.mxu0 0.0
  %383 = vmatpush1.msra.mxu0 0.0
  %384 = vmatprep.subr.mxu0 0.0
  %385 = vmatpush1.msra.mxu0 0.0
  %386 = vmatprep.subr.mxu0 0.0
  %387 = vmatpush1.msra.mxu0 0.0
  %388 = vmatprep.subr.mxu0 0.0
  %389 = vmatpush1.msra.mxu0 0.0
  %390 = vmatprep.subr.mxu0 0.0
  %391 = vmatpush1.msra.mxu0 0.0
  %392 = vmatprep.subr.mxu0 0.0
  %393 = vmatpush1.msra.mxu0 0.0
  %394 = vmatprep.subr.mxu0 0.0
  %395 = vmatpush1.msra.mxu0 0.0
  %396 = vmatprep.subr.mxu0 0.0
  %397 = vmatpush1.msra.mxu0 0.0
  %398 = vmatprep.subr.mxu0 0.0
  %399 = vmatpush1.msra.mxu0 0.0
  %400 = vmatprep.subr.mxu0 0.0
  %401 = vmatpush1.msra.mxu0 0.0
  %402 = vmatprep.subr.mxu0 0.0
  %403 = vmatpush1.msra.mxu0 0.0
  %404 = vmatprep.subr.mxu0 0.0
  %405 = vmatpush1.msra.mxu0 0.0
  %406 = vmatprep.mubr.f32.mxu0 0.0
  %v407 = vand.u32 %v37, 4294901760
  %408 = vmatmul.mubr.f32.gmra.mrb[0].mxu0 %v407
  %v409 = vpop.f32.mrb[0].mxu0
  %v410 = vadd.f32 %v336, %v409
  %v411 = vpop.f32.mrb[0].mxu0
  %412 = vdwg.mxu0
  %413 = vmatprep.subr.mxu0 0.0
  %v414 = vand.u32 %v27, 4294901760
  %415 = vmatpush1.msra.mxu0 %v414
  %416 = vmatprep.subr.mxu0 0.0
  %417 = vmatpush1.msra.mxu0 0.0
  %418 = vmatprep.subr.mxu0 0.0
  %419 = vmatpush1.msra.mxu0 0.0
  %420 = vmatprep.subr.mxu0 0.0
  %421 = vmatpush1.msra.mxu0 0.0
  %422 = vmatprep.subr.mxu0 0.0
  %423 = vmatpush1.msra.mxu0 0.0
  %424 = vmatprep.subr.mxu0 0.0
  %425 = vmatpush1.msra.mxu0 0.0
  %426 = vmatprep.subr.mxu0 0.0
  %427 = vmatpush1.msra.mxu0 0.0
  %428 = vmatprep.subr.mxu0 0.0
  %429 = vmatpush1.msra.mxu0 0.0
  %430 = vmatprep.subr.mxu0 0.0
  %431 = vmatpush1.msra.mxu0 0.0
  %432 = vmatprep.subr.mxu0 0.0
  %433 = vmatpush1.msra.mxu0 0.0
  %434 = vmatprep.subr.mxu0 0.0
  %435 = vmatpush1.msra.mxu0 0.0
  %436 = vmatprep.subr.mxu0 0.0
  %437 = vmatpush1.msra.mxu0 0.0
  %438 = vmatprep.subr.mxu0 0.0
  %439 = vmatpush1.msra.mxu0 0.0
  %440 = vmatprep.subr.mxu0 0.0
  %441 = vmatpush1.msra.mxu0 0.0
  %442 = vmatprep.subr.mxu0 0.0
  %443 = vmatpush1.msra.mxu0 0.0
  %444 = vmatprep.subr.mxu0 0.0
  %445 = vmatpush1.msra.mxu0 0.0
  %446 = vmatprep.subr.mxu0 0.0
  %447 = vmatpush1.msra.mxu0 0.0
  %448 = vmatprep.subr.mxu0 0.0
  %449 = vmatpush1.msra.mxu0 0.0
  %450 = vmatprep.subr.mxu0 0.0
  %451 = vmatpush1.msra.mxu0 0.0
  %452 = vmatprep.subr.mxu0 0.0
  %453 = vmatpush1.msra.mxu0 0.0
  %454 = vmatprep.subr.mxu0 0.0
  %455 = vmatpush1.msra.mxu0 0.0
  %456 = vmatprep.subr.mxu0 0.0
  %457 = vmatpush1.msra.mxu0 0.0
  %458 = vmatprep.subr.mxu0 0.0
  %459 = vmatpush1.msra.mxu0 0.0
  %460 = vmatprep.subr.mxu0 0.0
  %461 = vmatpush1.msra.mxu0 0.0
  %462 = vmatprep.subr.mxu0 0.0
  %463 = vmatpush1.msra.mxu0 0.0
  %464 = vmatprep.subr.mxu0 0.0
  %465 = vmatpush1.msra.mxu0 0.0
  %466 = vmatprep.subr.mxu0 0.0
  %467 = vmatpush1.msra.mxu0 0.0
  %468 = vmatprep.subr.mxu0 0.0
  %469 = vmatpush1.msra.mxu0 0.0
  %470 = vmatprep.subr.mxu0 0.0
  %471 = vmatpush1.msra.mxu0 0.0
  %472 = vmatprep.subr.mxu0 0.0
  %473 = vmatpush1.msra.mxu0 0.0
  %474 = vmatprep.subr.mxu0 0.0
  %475 = vmatpush1.msra.mxu0 0.0
  %476 = vmatprep.subr.mxu0 0.0
  %477 = vmatpush1.msra.mxu0 0.0
  %478 = vmatprep.mubr.f32.mxu0 0.0
  %v479 = vand.u32 %v37, 4294901760
  %480 = vmatmul.mubr.f32.gmra.mrb[0].mxu0 %v479
  %v481 = vpop.f32.mrb[0].mxu0
  %v482 = vadd.f32 %v410, %v481
  %v483 = vpop.f32.mrb[0].mxu0
  %484 = vdwg.mxu0
  %v485 = vmax.f32 %v482, 0.0
  %v486 = vld [vmem:[%s3] sm:$0xff]
  %v487 = vld [vmem:[%s3 + $0x8] sm:$0xff]
  %v488 = vld [vmem:[%s3 + $0x10] sm:$0xff]
  %v489 = vld [vmem:[%s3 + $0x18] sm:$0xff]
  %v490 = vld [vmem:[%s3 + $0x20] sm:$0xff]
  %v491 = vld [vmem:[%s3 + $0x28] sm:$0xff]
  %v492 = vld [vmem:[%s3 + $0x30] sm:$0xff]
  %v493 = vld [vmem:[%s3 + $0x38] sm:$0xff]
  %v494 = vld [vmem:[%s3 + $0x40] sm:$0xff]
  %v495 = vld [vmem:[%s3 + $0x48] sm:$0xff]
  %v496 = vld [vmem:[%s3 + $0x50] sm:$0xff]
  %v497 = vld [vmem:[%s3 + $0x58] sm:$0xff]
  %v498 = vld [vmem:[%s3 + $0x60] sm:$0xff]
  %v499 = vld [vmem:[%s3 + $0x68] sm:$0xff]
  %v500 = vld [vmem:[%s3 + $0x70] sm:$0xff]
  %v501 = vld [vmem:[%s3 + $0x78] sm:$0xff]
  %v502 = vld [vmem:[%s4] sm:$0x1]
  %v504 = vlaneseq
  %v505 = vshrl.u32 %v504, 7
  %v506 = vsub.s32 0, %v505
  %v507 = vrot.slane %v502, %v506
  %509 = vmatprep.subr.mxu0 0.0
  %v510 = vand.u32 %v486, 4294901760
  %511 = vmatpush1.msra.mxu0 %v510
  %512 = vmatprep.subr.mxu0 0.0
  %v513 = vand.u32 %v487, 4294901760
  %514 = vmatpush1.msra.mxu0 %v513
  %515 = vmatprep.subr.mxu0 0.0
  %v516 = vand.u32 %v488, 4294901760
  %517 = vmatpush1.msra.mxu0 %v516
  %518 = vmatprep.subr.mxu0 0.0
  %v519 = vand.u32 %v489, 4294901760
  %520 = vmatpush1.msra.mxu0 %v519
  %521 = vmatprep.subr.mxu0 0.0
  %v522 = vand.u32 %v490, 4294901760
  %523 = vmatpush1.msra.mxu0 %v522
  %524 = vmatprep.subr.mxu0 0.0
  %v525 = vand.u32 %v491, 4294901760
  %526 = vmatpush1.msra.mxu0 %v525
  %527 = vmatprep.subr.mxu0 0.0
  %v528 = vand.u32 %v492, 4294901760
  %529 = vmatpush1.msra.mxu0 %v528
  %530 = vmatprep.subr.mxu0 0.0
  %v531 = vand.u32 %v493, 4294901760
  %532 = vmatpush1.msra.mxu0 %v531
  %533 = vmatprep.subr.mxu0 0.0
  %v534 = vand.u32 %v494, 4294901760
  %535 = vmatpush1.msra.mxu0 %v534
  %536 = vmatprep.subr.mxu0 0.0
  %v537 = vand.u32 %v495, 4294901760
  %538 = vmatpush1.msra.mxu0 %v537
  %539 = vmatprep.subr.mxu0 0.0
  %v540 = vand.u32 %v496, 4294901760
  %541 = vmatpush1.msra.mxu0 %v540
  %542 = vmatprep.subr.mxu0 0.0
  %v543 = vand.u32 %v497, 4294901760
  %544 = vmatpush1.msra.mxu0 %v543
  %545 = vmatprep.subr.mxu0 0.0
  %v546 = vand.u32 %v498, 4294901760
  %547 = vmatpush1.msra.mxu0 %v546
  %548 = vmatprep.subr.mxu0 0.0
  %v549 = vand.u32 %v499, 4294901760
  %550 = vmatpush1.msra.mxu0 %v549
  %551 = vmatprep.subr.mxu0 0.0
  %v552 = vand.u32 %v500, 4294901760
  %553 = vmatpush1.msra.mxu0 %v552
  %554 = vmatprep.subr.mxu0 0.0
  %v555 = vand.u32 %v501, 4294901760
  %556 = vmatpush1.msra.mxu0 %v555
  %557 = vmatprep.subr.mxu0 0.0
  %558 = vmatpush1.msra.mxu0 0.0
  %559 = vmatprep.subr.mxu0 0.0
  %560 = vmatpush1.msra.mxu0 0.0
  %561 = vmatprep.subr.mxu0 0.0
  %562 = vmatpush1.msra.mxu0 0.0
  %563 = vmatprep.subr.mxu0 0.0
  %564 = vmatpush1.msra.mxu0 0.0
  %565 = vmatprep.subr.mxu0 0.0
  %566 = vmatpush1.msra.mxu0 0.0
  %567 = vmatprep.subr.mxu0 0.0
  %568 = vmatpush1.msra.mxu0 0.0
  %569 = vmatprep.subr.mxu0 0.0
  %570 = vmatpush1.msra.mxu0 0.0
  %571 = vmatprep.subr.mxu0 0.0
  %572 = vmatpush1.msra.mxu0 0.0
  %573 = vmatprep.subr.mxu0 0.0
  %574 = vmatpush1.msra.mxu0 0.0
  %575 = vmatprep.subr.mxu0 0.0
  %576 = vmatpush1.msra.mxu0 0.0
  %577 = vmatprep.subr.mxu0 0.0
  %578 = vmatpush1.msra.mxu0 0.0
  %579 = vmatprep.subr.mxu0 0.0
  %580 = vmatpush1.msra.mxu0 0.0
  %581 = vmatprep.subr.mxu0 0.0
  %582 = vmatpush1.msra.mxu0 0.0
  %583 = vmatprep.subr.mxu0 0.0
  %584 = vmatpush1.msra.mxu0 0.0
  %585 = vmatprep.subr.mxu0 0.0
  %586 = vmatpush1.msra.mxu0 0.0
  %587 = vmatprep.subr.mxu0 0.0
  %588 = vmatpush1.msra.mxu0 0.0
  %589 = vmatprep.mubr.f32.mxu0 0.0
  %v590 = vand.u32 %v485, 4294901760
  %v591 = vsub.f32 %v485, %v590
  %v592 = vand.u32 %v591, 4294901760
  %v593 = vsub.f32 %v591, %v592
  %v594 = vand.u32 %v593, 4294901760
  %595 = vmatmul.mubr.f32.gmra.mrb[0].mxu0 %v594
  %v596 = vpop.f32.mrb[0].mxu0
  %v597 = vadd.f32 %v507, %v596
  %v598 = vpop.f32.mrb[0].mxu0
  %599 = vdwg.mxu0
  %600 = vmatprep.subr.mxu0 0.0
  %v601 = vand.u32 %v486, 4294901760
  %v602 = vsub.f32 %v486, %v601
  %v603 = vand.u32 %v602, 4294901760
  %v604 = vsub.f32 %v602, %v603
  %v605 = vand.u32 %v604, 4294901760
  %606 = vmatpush1.msra.mxu0 %v605
  %607 = vmatprep.subr.mxu0 0.0
  %v608 = vand.u32 %v487, 4294901760
  %v609 = vsub.f32 %v487, %v608
  %v610 = vand.u32 %v609, 4294901760
  %v611 = vsub.f32 %v609, %v610
  %v612 = vand.u32 %v611, 4294901760
  %613 = vmatpush1.msra.mxu0 %v612
  %614 = vmatprep.subr.mxu0 0.0
  %v615 = vand.u32 %v488, 4294901760
  %v616 = vsub.f32 %v488, %v615
  %v617 = vand.u32 %v616, 4294901760
  %v618 = vsub.f32 %v616, %v617
  %v619 = vand.u32 %v618, 4294901760
  %620 = vmatpush1.msra.mxu0 %v619
  %621 = vmatprep.subr.mxu0 0.0
  %v622 = vand.u32 %v489, 4294901760
  %v623 = vsub.f32 %v489, %v622
  %v624 = vand.u32 %v623, 4294901760
  %v625 = vsub.f32 %v623, %v624
  %v626 = vand.u32 %v625, 4294901760
  %627 = vmatpush1.msra.mxu0 %v626
  %628 = vmatprep.subr.mxu0 0.0
  %v629 = vand.u32 %v490, 4294901760
  %v630 = vsub.f32 %v490, %v629
  %v631 = vand.u32 %v630, 4294901760
  %v632 = vsub.f32 %v630, %v631
  %v633 = vand.u32 %v632, 4294901760
  %634 = vmatpush1.msra.mxu0 %v633
  %635 = vmatprep.subr.mxu0 0.0
  %v636 = vand.u32 %v491, 4294901760
  %v637 = vsub.f32 %v491, %v636
  %v638 = vand.u32 %v637, 4294901760
  %v639 = vsub.f32 %v637, %v638
  %v640 = vand.u32 %v639, 4294901760
  %641 = vmatpush1.msra.mxu0 %v640
  %642 = vmatprep.subr.mxu0 0.0
  %v643 = vand.u32 %v492, 4294901760
  %v644 = vsub.f32 %v492, %v643
  %v645 = vand.u32 %v644, 4294901760
  %v646 = vsub.f32 %v644, %v645
  %v647 = vand.u32 %v646, 4294901760
  %648 = vmatpush1.msra.mxu0 %v647
  %649 = vmatprep.subr.mxu0 0.0
  %v650 = vand.u32 %v493, 4294901760
  %v651 = vsub.f32 %v493, %v650
  %v652 = vand.u32 %v651, 4294901760
  %v653 = vsub.f32 %v651, %v652
  %v654 = vand.u32 %v653, 4294901760
  %655 = vmatpush1.msra.mxu0 %v654
  %656 = vmatprep.subr.mxu0 0.0
  %v657 = vand.u32 %v494, 4294901760
  %v658 = vsub.f32 %v494, %v657
  %v659 = vand.u32 %v658, 4294901760
  %v660 = vsub.f32 %v658, %v659
  %v661 = vand.u32 %v660, 4294901760
  %662 = vmatpush1.msra.mxu0 %v661
  %663 = vmatprep.subr.mxu0 0.0
  %v664 = vand.u32 %v495, 4294901760
  %v665 = vsub.f32 %v495, %v664
  %v666 = vand.u32 %v665, 4294901760
  %v667 = vsub.f32 %v665, %v666
  %v668 = vand.u32 %v667, 4294901760
  %669 = vmatpush1.msra.mxu0 %v668
  %670 = vmatprep.subr.mxu0 0.0
  %v671 = vand.u32 %v496, 4294901760
  %v672 = vsub.f32 %v496, %v671
  %v673 = vand.u32 %v672, 4294901760
  %v674 = vsub.f32 %v672, %v673
  %v675 = vand.u32 %v674, 4294901760
  %676 = vmatpush1.msra.mxu0 %v675
  %677 = vmatprep.subr.mxu0 0.0
  %v678 = vand.u32 %v497, 4294901760
  %v679 = vsub.f32 %v497, %v678
  %v680 = vand.u32 %v679, 4294901760
  %v681 = vsub.f32 %v679, %v680
  %v682 = vand.u32 %v681, 4294901760
  %683 = vmatpush1.msra.mxu0 %v682
  %684 = vmatprep.subr.mxu0 0.0
  %v685 = vand.u32 %v498, 4294901760
  %v686 = vsub.f32 %v498, %v685
  %v687 = vand.u32 %v686, 4294901760
  %v688 = vsub.f32 %v686, %v687
  %v689 = vand.u32 %v688, 4294901760
  %690 = vmatpush1.msra.mxu0 %v689
  %691 = vmatprep.subr.mxu0 0.0
  %v692 = vand.u32 %v499, 4294901760
  %v693 = vsub.f32 %v499, %v692
  %v694 = vand.u32 %v693, 4294901760
  %v695 = vsub.f32 %v693, %v694
  %v696 = vand.u32 %v695, 4294901760
  %697 = vmatpush1.msra.mxu0 %v696
  %698 = vmatprep.subr.mxu0 0.0
  %v699 = vand.u32 %v500, 4294901760
  %v700 = vsub.f32 %v500, %v699
  %v701 = vand.u32 %v700, 4294901760
  %v702 = vsub.f32 %v700, %v701
  %v703 = vand.u32 %v702, 4294901760
  %704 = vmatpush1.msra.mxu0 %v703
  %705 = vmatprep.subr.mxu0 0.0
  %v706 = vand.u32 %v501, 4294901760
  %v707 = vsub.f32 %v501, %v706
  %v708 = vand.u32 %v707, 4294901760
  %v709 = vsub.f32 %v707, %v708
  %v710 = vand.u32 %v709, 4294901760
  %711 = vmatpush1.msra.mxu0 %v710
  %712 = vmatprep.subr.mxu0 0.0
  %713 = vmatpush1.msra.mxu0 0.0
  %714 = vmatprep.subr.mxu0 0.0
  %715 = vmatpush1.msra.mxu0 0.0
  %716 = vmatprep.subr.mxu0 0.0
  %717 = vmatpush1.msra.mxu0 0.0
  %718 = vmatprep.subr.mxu0 0.0
  %719 = vmatpush1.msra.mxu0 0.0
  %720 = vmatprep.subr.mxu0 0.0
  %721 = vmatpush1.msra.mxu0 0.0
  %722 = vmatprep.subr.mxu0 0.0
  %723 = vmatpush1.msra.mxu0 0.0
  %724 = vmatprep.subr.mxu0 0.0
  %725 = vmatpush1.msra.mxu0 0.0
  %726 = vmatprep.subr.mxu0 0.0
  %727 = vmatpush1.msra.mxu0 0.0
  %728 = vmatprep.subr.mxu0 0.0
  %729 = vmatpush1.msra.mxu0 0.0
  %730 = vmatprep.subr.mxu0 0.0
  %731 = vmatpush1.msra.mxu0 0.0
  %732 = vmatprep.subr.mxu0 0.0
  %733 = vmatpush1.msra.mxu0 0.0
  %734 = vmatprep.subr.mxu0 0.0
  %735 = vmatpush1.msra.mxu0 0.0
  %736 = vmatprep.subr.mxu0 0.0
  %737 = vmatpush1.msra.mxu0 0.0
  %738 = vmatprep.subr.mxu0 0.0
  %739 = vmatpush1.msra.mxu0 0.0
  %740 = vmatprep.subr.mxu0 0.0
  %741 = vmatpush1.msra.mxu0 0.0
  %742 = vmatprep.subr.mxu0 0.0
  %743 = vmatpush1.msra.mxu0 0.0
  %744 = vmatprep.mubr.f32.mxu0 0.0
  %v745 = vand.u32 %v485, 4294901760
  %746 = vmatmul.mubr.f32.gmra.mrb[0].mxu0 %v745
  %v747 = vpop.f32.mrb[0].mxu0
  %v748 = vadd.f32 %v597, %v747
  %v749 = vpop.f32.mrb[0].mxu0
  %750 = vdwg.mxu0
  %751 = vmatprep.subr.mxu0 0.0
  %v752 = vand.u32 %v486, 4294901760
  %v753 = vsub.f32 %v486, %v752
  %754 = vmatpush1.msra.mxu0 %v753
  %755 = vmatprep.subr.mxu0 0.0
  %v756 = vand.u32 %v487, 4294901760
  %v757 = vsub.f32 %v487, %v756
  %758 = vmatpush1.msra.mxu0 %v757
  %759 = vmatprep.subr.mxu0 0.0
  %v760 = vand.u32 %v488, 4294901760
  %v761 = vsub.f32 %v488, %v760
  %762 = vmatpush1.msra.mxu0 %v761
  %763 = vmatprep.subr.mxu0 0.0
  %v764 = vand.u32 %v489, 4294901760
  %v765 = vsub.f32 %v489, %v764
  %766 = vmatpush1.msra.mxu0 %v765
  %767 = vmatprep.subr.mxu0 0.0
  %v768 = vand.u32 %v490, 4294901760
  %v769 = vsub.f32 %v490, %v768
  %770 = vmatpush1.msra.mxu0 %v769
  %771 = vmatprep.subr.mxu0 0.0
  %v772 = vand.u32 %v491, 4294901760
  %v773 = vsub.f32 %v491, %v772
  %774 = vmatpush1.msra.mxu0 %v773
  %775 = vmatprep.subr.mxu0 0.0
  %v776 = vand.u32 %v492, 4294901760
  %v777 = vsub.f32 %v492, %v776
  %778 = vmatpush1.msra.mxu0 %v777
  %779 = vmatprep.subr.mxu0 0.0
  %v780 = vand.u32 %v493, 4294901760
  %v781 = vsub.f32 %v493, %v780
  %782 = vmatpush1.msra.mxu0 %v781
  %783 = vmatprep.subr.mxu0 0.0
  %v784 = vand.u32 %v494, 4294901760
  %v785 = vsub.f32 %v494, %v784
  %786 = vmatpush1.msra.mxu0 %v785
  %787 = vmatprep.subr.mxu0 0.0
  %v788 = vand.u32 %v495, 4294901760
  %v789 = vsub.f32 %v495, %v788
  %790 = vmatpush1.msra.mxu0 %v789
  %791 = vmatprep.subr.mxu0 0.0
  %v792 = vand.u32 %v496, 4294901760
  %v793 = vsub.f32 %v496, %v792
  %794 = vmatpush1.msra.mxu0 %v793
  %795 = vmatprep.subr.mxu0 0.0
  %v796 = vand.u32 %v497, 4294901760
  %v797 = vsub.f32 %v497, %v796
  %798 = vmatpush1.msra.mxu0 %v797
  %799 = vmatprep.subr.mxu0 0.0
  %v800 = vand.u32 %v498, 4294901760
  %v801 = vsub.f32 %v498, %v800
  %802 = vmatpush1.msra.mxu0 %v801
  %803 = vmatprep.subr.mxu0 0.0
  %v804 = vand.u32 %v499, 4294901760
  %v805 = vsub.f32 %v499, %v804
  %806 = vmatpush1.msra.mxu0 %v805
  %807 = vmatprep.subr.mxu0 0.0
  %v808 = vand.u32 %v500, 4294901760
  %v809 = vsub.f32 %v500, %v808
  %810 = vmatpush1.msra.mxu0 %v809
  %811 = vmatprep.subr.mxu0 0.0
  %v812 = vand.u32 %v501, 4294901760
  %v813 = vsub.f32 %v501, %v812
  %814 = vmatpush1.msra.mxu0 %v813
  %815 = vmatprep.subr.mxu0 0.0
  %816 = vmatpush1.msra.mxu0 0.0
  %817 = vmatprep.subr.mxu0 0.0
  %818 = vmatpush1.msra.mxu0 0.0
  %819 = vmatprep.subr.mxu0 0.0
  %820 = vmatpush1.msra.mxu0 0.0
  %821 = vmatprep.subr.mxu0 0.0
  %822 = vmatpush1.msra.mxu0 0.0
  %823 = vmatprep.subr.mxu0 0.0
  %824 = vmatpush1.msra.mxu0 0.0
  %825 = vmatprep.subr.mxu0 0.0
  %826 = vmatpush1.msra.mxu0 0.0
  %827 = vmatprep.subr.mxu0 0.0
  %828 = vmatpush1.msra.mxu0 0.0
  %829 = vmatprep.subr.mxu0 0.0
  %830 = vmatpush1.msra.mxu0 0.0
  %831 = vmatprep.subr.mxu0 0.0
  %832 = vmatpush1.msra.mxu0 0.0
  %833 = vmatprep.subr.mxu0 0.0
  %834 = vmatpush1.msra.mxu0 0.0
  %835 = vmatprep.subr.mxu0 0.0
  %836 = vmatpush1.msra.mxu0 0.0
  %837 = vmatprep.subr.mxu0 0.0
  %838 = vmatpush1.msra.mxu0 0.0
  %839 = vmatprep.subr.mxu0 0.0
  %840 = vmatpush1.msra.mxu0 0.0
  %841 = vmatprep.subr.mxu0 0.0
  %842 = vmatpush1.msra.mxu0 0.0
  %843 = vmatprep.subr.mxu0 0.0
  %844 = vmatpush1.msra.mxu0 0.0
  %845 = vmatprep.subr.mxu0 0.0
  %846 = vmatpush1.msra.mxu0 0.0
  %847 = vmatprep.mubr.f32.mxu0 0.0
  %v848 = vand.u32 %v485, 4294901760
  %v849 = vsub.f32 %v485, %v848
  %850 = vmatmul.mubr.f32.gmra.mrb[0].mxu0 %v849
  %v851 = vpop.f32.mrb[0].mxu0
  %v852 = vadd.f32 %v748, %v851
  %v853 = vpop.f32.mrb[0].mxu0
  %854 = vdwg.mxu0
  %855 = vmatprep.subr.mxu0 0.0
  %v856 = vand.u32 %v486, 4294901760
  %857 = vmatpush1.msra.mxu0 %v856
  %858 = vmatprep.subr.mxu0 0.0
  %v859 = vand.u32 %v487, 4294901760
  %860 = vmatpush1.msra.mxu0 %v859
  %861 = vmatprep.subr.mxu0 0.0
  %v862 = vand.u32 %v488, 4294901760
  %863 = vmatpush1.msra.mxu0 %v862
  %864 = vmatprep.subr.mxu0 0.0
  %v865 = vand.u32 %v489, 4294901760
  %866 = vmatpush1.msra.mxu0 %v865
  %867 = vmatprep.subr.mxu0 0.0
  %v868 = vand.u32 %v490, 4294901760
  %869 = vmatpush1.msra.mxu0 %v868
  %870 = vmatprep.subr.mxu0 0.0
  %v871 = vand.u32 %v491, 4294901760
  %872 = vmatpush1.msra.mxu0 %v871
  %873 = vmatprep.subr.mxu0 0.0
  %v874 = vand.u32 %v492, 4294901760
  %875 = vmatpush1.msra.mxu0 %v874
  %876 = vmatprep.subr.mxu0 0.0
  %v877 = vand.u32 %v493, 4294901760
  %878 = vmatpush1.msra.mxu0 %v877
  %879 = vmatprep.subr.mxu0 0.0
  %v880 = vand.u32 %v494, 4294901760
  %881 = vmatpush1.msra.mxu0 %v880
  %882 = vmatprep.subr.mxu0 0.0
  %v883 = vand.u32 %v495, 4294901760
  %884 = vmatpush1.msra.mxu0 %v883
  %885 = vmatprep.subr.mxu0 0.0
  %v886 = vand.u32 %v496, 4294901760
  %887 = vmatpush1.msra.mxu0 %v886
  %888 = vmatprep.subr.mxu0 0.0
  %v889 = vand.u32 %v497, 4294901760
  %890 = vmatpush1.msra.mxu0 %v889
  %891 = vmatprep.subr.mxu0 0.0
  %v892 = vand.u32 %v498, 4294901760
  %893 = vmatpush1.msra.mxu0 %v892
  %894 = vmatprep.subr.mxu0 0.0
  %v895 = vand.u32 %v499, 4294901760
  %896 = vmatpush1.msra.mxu0 %v895
  %897 = vmatprep.subr.mxu0 0.0
  %v898 = vand.u32 %v500, 4294901760
  %899 = vmatpush1.msra.mxu0 %v898
  %900 = vmatprep.subr.mxu0 0.0
  %v901 = vand.u32 %v501, 4294901760
  %902 = vmatpush1.msra.mxu0 %v901
  %903 = vmatprep.subr.mxu0 0.0
  %904 = vmatpush1.msra.mxu0 0.0
  %905 = vmatprep.subr.mxu0 0.0
  %906 = vmatpush1.msra.mxu0 0.0
  %907 = vmatprep.subr.mxu0 0.0
  %908 = vmatpush1.msra.mxu0 0.0
  %909 = vmatprep.subr.mxu0 0.0
  %910 = vmatpush1.msra.mxu0 0.0
  %911 = vmatprep.subr.mxu0 0.0
  %912 = vmatpush1.msra.mxu0 0.0
  %913 = vmatprep.subr.mxu0 0.0
  %914 = vmatpush1.msra.mxu0 0.0
  %915 = vmatprep.subr.mxu0 0.0
  %916 = vmatpush1.msra.mxu0 0.0
  %917 = vmatprep.subr.mxu0 0.0
  %918 = vmatpush1.msra.mxu0 0.0
  %919 = vmatprep.subr.mxu0 0.0
  %920 = vmatpush1.msra.mxu0 0.0
  %921 = vmatprep.subr.mxu0 0.0
  %922 = vmatpush1.msra.mxu0 0.0
  %923 = vmatprep.subr.mxu0 0.0
  %924 = vmatpush1.msra.mxu0 0.0
  %925 = vmatprep.subr.mxu0 0.0
  %926 = vmatpush1.msra.mxu0 0.0
  %927 = vmatprep.subr.mxu0 0.0
  %928 = vmatpush1.msra.mxu0 0.0
  %929 = vmatprep.subr.mxu0 0.0
  %930 = vmatpush1.msra.mxu0 0.0
  %931 = vmatprep.subr.mxu0 0.0
  %932 = vmatpush1.msra.mxu0 0.0
  %933 = vmatprep.subr.mxu0 0.0
  %934 = vmatpush1.msra.mxu0 0.0
  %935 = vmatprep.mubr.f32.mxu0 0.0
  %v936 = vand.u32 %v485, 4294901760
  %v937 = vsub.f32 %v485, %v936
  %v938 = vand.u32 %v937, 4294901760
  %939 = vmatmul.mubr.f32.gmra.mrb[0].mxu0 %v938
  %v940 = vpop.f32.mrb[0].mxu0
  %v941 = vadd.f32 %v852, %v940
  %v942 = vpop.f32.mrb[0].mxu0
  %943 = vdwg.mxu0
  %944 = vmatprep.subr.mxu0 0.0
  %v945 = vand.u32 %v486, 4294901760
  %v946 = vsub.f32 %v486, %v945
  %v947 = vand.u32 %v946, 4294901760
  %948 = vmatpush1.msra.mxu0 %v947
  %949 = vmatprep.subr.mxu0 0.0
  %v950 = vand.u32 %v487, 4294901760
  %v951 = vsub.f32 %v487, %v950
  %v952 = vand.u32 %v951, 4294901760
  %953 = vmatpush1.msra.mxu0 %v952
  %954 = vmatprep.subr.mxu0 0.0
  %v955 = vand.u32 %v488, 4294901760
  %v956 = vsub.f32 %v488, %v955
  %v957 = vand.u32 %v956, 4294901760
  %958 = vmatpush1.msra.mxu0 %v957
  %959 = vmatprep.subr.mxu0 0.0
  %v960 = vand.u32 %v489, 4294901760
  %v961 = vsub.f32 %v489, %v960
  %v962 = vand.u32 %v961, 4294901760
  %963 = vmatpush1.msra.mxu0 %v962
  %964 = vmatprep.subr.mxu0 0.0
  %v965 = vand.u32 %v490, 4294901760
  %v966 = vsub.f32 %v490, %v965
  %v967 = vand.u32 %v966, 4294901760
  %968 = vmatpush1.msra.mxu0 %v967
  %969 = vmatprep.subr.mxu0 0.0
  %v970 = vand.u32 %v491, 4294901760
  %v971 = vsub.f32 %v491, %v970
  %v972 = vand.u32 %v971, 4294901760
  %973 = vmatpush1.msra.mxu0 %v972
  %974 = vmatprep.subr.mxu0 0.0
  %v975 = vand.u32 %v492, 4294901760
  %v976 = vsub.f32 %v492, %v975
  %v977 = vand.u32 %v976, 4294901760
  %978 = vmatpush1.msra.mxu0 %v977
  %979 = vmatprep.subr.mxu0 0.0
  %v980 = vand.u32 %v493, 4294901760
  %v981 = vsub.f32 %v493, %v980
  %v982 = vand.u32 %v981, 4294901760
  %983 = vmatpush1.msra.mxu0 %v982
  %984 = vmatprep.subr.mxu0 0.0
  %v985 = vand.u32 %v494, 4294901760
  %v986 = vsub.f32 %v494, %v985
  %v987 = vand.u32 %v986, 4294901760
  %988 = vmatpush1.msra.mxu0 %v987
  %989 = vmatprep.subr.mxu0 0.0
  %v990 = vand.u32 %v495, 4294901760
  %v991 = vsub.f32 %v495, %v990
  %v992 = vand.u32 %v991, 4294901760
  %993 = vmatpush1.msra.mxu0 %v992
  %994 = vmatprep.subr.mxu0 0.0
  %v995 = vand.u32 %v496, 4294901760
  %v996 = vsub.f32 %v496, %v995
  %v997 = vand.u32 %v996, 4294901760
  %998 = vmatpush1.msra.mxu0 %v997
  %999 = vmatprep.subr.mxu0 0.0
  %v1000 = vand.u32 %v497, 4294901760
  %v1001 = vsub.f32 %v497, %v1000
  %v1002 = vand.u32 %v1001, 4294901760
  %1003 = vmatpush1.msra.mxu0 %v1002
  %1004 = vmatprep.subr.mxu0 0.0
  %v1005 = vand.u32 %v498, 4294901760
  %v1006 = vsub.f32 %v498, %v1005
  %v1007 = vand.u32 %v1006, 4294901760
  %1008 = vmatpush1.msra.mxu0 %v1007
  %1009 = vmatprep.subr.mxu0 0.0
  %v1010 = vand.u32 %v499, 4294901760
  %v1011 = vsub.f32 %v499, %v1010
  %v1012 = vand.u32 %v1011, 4294901760
  %1013 = vmatpush1.msra.mxu0 %v1012
  %1014 = vmatprep.subr.mxu0 0.0
  %v1015 = vand.u32 %v500, 4294901760
  %v1016 = vsub.f32 %v500, %v1015
  %v1017 = vand.u32 %v1016, 4294901760
  %1018 = vmatpush1.msra.mxu0 %v1017
  %1019 = vmatprep.subr.mxu0 0.0
  %v1020 = vand.u32 %v501, 4294901760
  %v1021 = vsub.f32 %v501, %v1020
  %v1022 = vand.u32 %v1021, 4294901760
  %1023 = vmatpush1.msra.mxu0 %v1022
  %1024 = vmatprep.subr.mxu0 0.0
  %1025 = vmatpush1.msra.mxu0 0.0
  %1026 = vmatprep.subr.mxu0 0.0
  %1027 = vmatpush1.msra.mxu0 0.0
  %1028 = vmatprep.subr.mxu0 0.0
  %1029 = vmatpush1.msra.mxu0 0.0
  %1030 = vmatprep.subr.mxu0 0.0
  %1031 = vmatpush1.msra.mxu0 0.0
  %1032 = vmatprep.subr.mxu0 0.0
  %1033 = vmatpush1.msra.mxu0 0.0
  %1034 = vmatprep.subr.mxu0 0.0
  %1035 = vmatpush1.msra.mxu0 0.0
  %1036 = vmatprep.subr.mxu0 0.0
  %1037 = vmatpush1.msra.mxu0 0.0
  %1038 = vmatprep.subr.mxu0 0.0
  %1039 = vmatpush1.msra.mxu0 0.0
  %1040 = vmatprep.subr.mxu0 0.0
  %1041 = vmatpush1.msra.mxu0 0.0
  %1042 = vmatprep.subr.mxu0 0.0
  %1043 = vmatpush1.msra.mxu0 0.0
  %1044 = vmatprep.subr.mxu0 0.0
  %1045 = vmatpush1.msra.mxu0 0.0
  %1046 = vmatprep.subr.mxu0 0.0
  %1047 = vmatpush1.msra.mxu0 0.0
  %1048 = vmatprep.subr.mxu0 0.0
  %1049 = vmatpush1.msra.mxu0 0.0
  %1050 = vmatprep.subr.mxu0 0.0
  %1051 = vmatpush1.msra.mxu0 0.0
  %1052 = vmatprep.subr.mxu0 0.0
  %1053 = vmatpush1.msra.mxu0 0.0
  %1054 = vmatprep.subr.mxu0 0.0
  %1055 = vmatpush1.msra.mxu0 0.0
  %1056 = vmatprep.mubr.f32.mxu0 0.0
  %v1057 = vand.u32 %v485, 4294901760
  %1058 = vmatmul.mubr.f32.gmra.mrb[0].mxu0 %v1057
  %v1059 = vpop.f32.mrb[0].mxu0
  %v1060 = vadd.f32 %v941, %v1059
  %v1061 = vpop.f32.mrb[0].mxu0
  %1062 = vdwg.mxu0
  %1063 = vmatprep.subr.mxu0 0.0
  %v1064 = vand.u32 %v486, 4294901760
  %1065 = vmatpush1.msra.mxu0 %v1064
  %1066 = vmatprep.subr.mxu0 0.0
  %v1067 = vand.u32 %v487, 4294901760
  %1068 = vmatpush1.msra.mxu0 %v1067
  %1069 = vmatprep.subr.mxu0 0.0
  %v1070 = vand.u32 %v488, 4294901760
  %1071 = vmatpush1.msra.mxu0 %v1070
  %1072 = vmatprep.subr.mxu0 0.0
  %v1073 = vand.u32 %v489, 4294901760
  %1074 = vmatpush1.msra.mxu0 %v1073
  %1075 = vmatprep.subr.mxu0 0.0
  %v1076 = vand.u32 %v490, 4294901760
  %1077 = vmatpush1.msra.mxu0 %v1076
  %1078 = vmatprep.subr.mxu0 0.0
  %v1079 = vand.u32 %v491, 4294901760
  %1080 = vmatpush1.msra.mxu0 %v1079
  %1081 = vmatprep.subr.mxu0 0.0
  %v1082 = vand.u32 %v492, 4294901760
  %1083 = vmatpush1.msra.mxu0 %v1082
  %1084 = vmatprep.subr.mxu0 0.0
  %v1085 = vand.u32 %v493, 4294901760
  %1086 = vmatpush1.msra.mxu0 %v1085
  %1087 = vmatprep.subr.mxu0 0.0
  %v1088 = vand.u32 %v494, 4294901760
  %1089 = vmatpush1.msra.mxu0 %v1088
  %1090 = vmatprep.subr.mxu0 0.0
  %v1091 = vand.u32 %v495, 4294901760
  %1092 = vmatpush1.msra.mxu0 %v1091
  %1093 = vmatprep.subr.mxu0 0.0
  %v1094 = vand.u32 %v496, 4294901760
  %1095 = vmatpush1.msra.mxu0 %v1094
  %1096 = vmatprep.subr.mxu0 0.0
  %v1097 = vand.u32 %v497, 4294901760
  %1098 = vmatpush1.msra.mxu0 %v1097
  %1099 = vmatprep.subr.mxu0 0.0
  %v1100 = vand.u32 %v498, 4294901760
  %1101 = vmatpush1.msra.mxu0 %v1100
  %1102 = vmatprep.subr.mxu0 0.0
  %v1103 = vand.u32 %v499, 4294901760
  %1104 = vmatpush1.msra.mxu0 %v1103
  %1105 = vmatprep.subr.mxu0 0.0
  %v1106 = vand.u32 %v500, 4294901760
  %1107 = vmatpush1.msra.mxu0 %v1106
  %1108 = vmatprep.subr.mxu0 0.0
  %v1109 = vand.u32 %v501, 4294901760
  %1110 = vmatpush1.msra.mxu0 %v1109
  %1111 = vmatprep.subr.mxu0 0.0
  %1112 = vmatpush1.msra.mxu0 0.0
  %1113 = vmatprep.subr.mxu0 0.0
  %1114 = vmatpush1.msra.mxu0 0.0
  %1115 = vmatprep.subr.mxu0 0.0
  %1116 = vmatpush1.msra.mxu0 0.0
  %1117 = vmatprep.subr.mxu0 0.0
  %1118 = vmatpush1.msra.mxu0 0.0
  %1119 = vmatprep.subr.mxu0 0.0
  %1120 = vmatpush1.msra.mxu0 0.0
  %1121 = vmatprep.subr.mxu0 0.0
  %1122 = vmatpush1.msra.mxu0 0.0
  %1123 = vmatprep.subr.mxu0 0.0
  %1124 = vmatpush1.msra.mxu0 0.0
  %1125 = vmatprep.subr.mxu0 0.0
  %1126 = vmatpush1.msra.mxu0 0.0
  %1127 = vmatprep.subr.mxu0 0.0
  %1128 = vmatpush1.msra.mxu0 0.0
  %1129 = vmatprep.subr.mxu0 0.0
  %1130 = vmatpush1.msra.mxu0 0.0
  %1131 = vmatprep.subr.mxu0 0.0
  %1132 = vmatpush1.msra.mxu0 0.0
  %1133 = vmatprep.subr.mxu0 0.0
  %1134 = vmatpush1.msra.mxu0 0.0
  %1135 = vmatprep.subr.mxu0 0.0
  %1136 = vmatpush1.msra.mxu0 0.0
  %1137 = vmatprep.subr.mxu0 0.0
  %1138 = vmatpush1.msra.mxu0 0.0
  %1139 = vmatprep.subr.mxu0 0.0
  %1140 = vmatpush1.msra.mxu0 0.0
  %1141 = vmatprep.subr.mxu0 0.0
  %1142 = vmatpush1.msra.mxu0 0.0
  %1143 = vmatprep.mubr.f32.mxu0 0.0
  %v1144 = vand.u32 %v485, 4294901760
  %1145 = vmatmul.mubr.f32.gmra.mrb[0].mxu0 %v1144
  %v1146 = vpop.f32.mrb[0].mxu0
  %v1147 = vadd.f32 %v1060, %v1146
  %v1148 = vpop.f32.mrb[0].mxu0
  %1149 = vdwg.mxu0
  %v1150 = vmax.f32 %v1147, 0.0
  %v1151 = vld [vmem:[%s5] sm:$0xff]
  %v1152 = vld [vmem:[%s5 + $0x8] sm:$0xff]
  %v1153 = vld [vmem:[%s5 + $0x10] sm:$0xff]
  %v1154 = vld [vmem:[%s5 + $0x18] sm:$0xff]
  %v1155 = vld [vmem:[%s5 + $0x20] sm:$0xff]
  %v1156 = vld [vmem:[%s5 + $0x28] sm:$0xff]
  %v1157 = vld [vmem:[%s5 + $0x30] sm:$0xff]
  %v1158 = vld [vmem:[%s5 + $0x38] sm:$0xff]
  %v1159 = vld [vmem:[%s5 + $0x40] sm:$0xff]
  %v1160 = vld [vmem:[%s5 + $0x48] sm:$0xff]
  %v1161 = vld [vmem:[%s5 + $0x50] sm:$0xff]
  %v1162 = vld [vmem:[%s5 + $0x58] sm:$0xff]
  %v1163 = vld [vmem:[%s5 + $0x60] sm:$0xff]
  %v1164 = vld [vmem:[%s5 + $0x68] sm:$0xff]
  %v1165 = vld [vmem:[%s5 + $0x70] sm:$0xff]
  %v1166 = vld [vmem:[%s5 + $0x78] sm:$0xff]
  %v1167 = vld [vmem:[%s6] sm:$0x1]
  %v1169 = vlaneseq
  %v1170 = vshrl.u32 %v1169, 7
  %v1171 = vsub.s32 0, %v1170
  %v1172 = vrot.slane %v1167, %v1171
  %1174 = vmatprep.subr.mxu0 0.0
  %v1175 = vand.u32 %v1151, 4294901760
  %1176 = vmatpush1.msra.mxu0 %v1175
  %1177 = vmatprep.subr.mxu0 0.0
  %v1178 = vand.u32 %v1152, 4294901760
  %1179 = vmatpush1.msra.mxu0 %v1178
  %1180 = vmatprep.subr.mxu0 0.0
  %v1181 = vand.u32 %v1153, 4294901760
  %1182 = vmatpush1.msra.mxu0 %v1181
  %1183 = vmatprep.subr.mxu0 0.0
  %v1184 = vand.u32 %v1154, 4294901760
  %1185 = vmatpush1.msra.mxu0 %v1184
  %1186 = vmatprep.subr.mxu0 0.0
  %v1187 = vand.u32 %v1155, 4294901760
  %1188 = vmatpush1.msra.mxu0 %v1187
  %1189 = vmatprep.subr.mxu0 0.0
  %v1190 = vand.u32 %v1156, 4294901760
  %1191 = vmatpush1.msra.mxu0 %v1190
  %1192 = vmatprep.subr.mxu0 0.0
  %v1193 = vand.u32 %v1157, 4294901760
  %1194 = vmatpush1.msra.mxu0 %v1193
  %1195 = vmatprep.subr.mxu0 0.0
  %v1196 = vand.u32 %v1158, 4294901760
  %1197 = vmatpush1.msra.mxu0 %v1196
  %1198 = vmatprep.subr.mxu0 0.0
  %v1199 = vand.u32 %v1159, 4294901760
  %1200 = vmatpush1.msra.mxu0 %v1199
  %1201 = vmatprep.subr.mxu0 0.0
  %v1202 = vand.u32 %v1160, 4294901760
  %1203 = vmatpush1.msra.mxu0 %v1202
  %1204 = vmatprep.subr.mxu0 0.0
  %v1205 = vand.u32 %v1161, 4294901760
  %1206 = vmatpush1.msra.mxu0 %v1205
  %1207 = vmatprep.subr.mxu0 0.0
  %v1208 = vand.u32 %v1162, 4294901760
  %1209 = vmatpush1.msra.mxu0 %v1208
  %1210 = vmatprep.subr.mxu0 0.0
  %v1211 = vand.u32 %v1163, 4294901760
  %1212 = vmatpush1.msra.mxu0 %v1211
  %1213 = vmatprep.subr.mxu0 0.0
  %v1214 = vand.u32 %v1164, 4294901760
  %1215 = vmatpush1.msra.mxu0 %v1214
  %1216 = vmatprep.subr.mxu0 0.0
  %v1217 = vand.u32 %v1165, 4294901760
  %1218 = vmatpush1.msra.mxu0 %v1217
  %1219 = vmatprep.subr.mxu0 0.0
  %v1220 = vand.u32 %v1166, 4294901760
  %1221 = vmatpush1.msra.mxu0 %v1220
  %1222 = vmatprep.subr.mxu0 0.0
  %1223 = vmatpush1.msra.mxu0 0.0
  %1224 = vmatprep.subr.mxu0 0.0
  %1225 = vmatpush1.msra.mxu0 0.0
  %1226 = vmatprep.subr.mxu0 0.0
  %1227 = vmatpush1.msra.mxu0 0.0
  %1228 = vmatprep.subr.mxu0 0.0
  %1229 = vmatpush1.msra.mxu0 0.0
  %1230 = vmatprep.subr.mxu0 0.0
  %1231 = vmatpush1.msra.mxu0 0.0
  %1232 = vmatprep.subr.mxu0 0.0
  %1233 = vmatpush1.msra.mxu0 0.0
  %1234 = vmatprep.subr.mxu0 0.0
  %1235 = vmatpush1.msra.mxu0 0.0
  %1236 = vmatprep.subr.mxu0 0.0
  %1237 = vmatpush1.msra.mxu0 0.0
  %1238 = vmatprep.subr.mxu0 0.0
  %1239 = vmatpush1.msra.mxu0 0.0
  %1240 = vmatprep.subr.mxu0 0.0
  %1241 = vmatpush1.msra.mxu0 0.0
  %1242 = vmatprep.subr.mxu0 0.0
  %1243 = vmatpush1.msra.mxu0 0.0
  %1244 = vmatprep.subr.mxu0 0.0
  %1245 = vmatpush1.msra.mxu0 0.0
  %1246 = vmatprep.subr.mxu0 0.0
  %1247 = vmatpush1.msra.mxu0 0.0
  %1248 = vmatprep.subr.mxu0 0.0
  %1249 = vmatpush1.msra.mxu0 0.0
  %1250 = vmatprep.subr.mxu0 0.0
  %1251 = vmatpush1.msra.mxu0 0.0
  %1252 = vmatprep.subr.mxu0 0.0
  %1253 = vmatpush1.msra.mxu0 0.0
  %1254 = vmatprep.mubr.f32.mxu0 0.0
  %v1255 = vand.u32 %v1150, 4294901760
  %v1256 = vsub.f32 %v1150, %v1255
  %v1257 = vand.u32 %v1256, 4294901760
  %v1258 = vsub.f32 %v1256, %v1257
  %v1259 = vand.u32 %v1258, 4294901760
  %1260 = vmatmul.mubr.f32.gmra.mrb[0].mxu0 %v1259
  %v1261 = vpop.f32.mrb[0].mxu0
  %v1262 = vadd.f32 %v1172, %v1261
  %v1263 = vpop.f32.mrb[0].mxu0
  %1264 = vdwg.mxu0
  %1265 = vmatprep.subr.mxu0 0.0
  %v1266 = vand.u32 %v1151, 4294901760
  %v1267 = vsub.f32 %v1151, %v1266
  %v1268 = vand.u32 %v1267, 4294901760
  %v1269 = vsub.f32 %v1267, %v1268
  %v1270 = vand.u32 %v1269, 4294901760
  %1271 = vmatpush1.msra.mxu0 %v1270
  %1272 = vmatprep.subr.mxu0 0.0
  %v1273 = vand.u32 %v1152, 4294901760
  %v1274 = vsub.f32 %v1152, %v1273
  %v1275 = vand.u32 %v1274, 4294901760
  %v1276 = vsub.f32 %v1274, %v1275
  %v1277 = vand.u32 %v1276, 4294901760
  %1278 = vmatpush1.msra.mxu0 %v1277
  %1279 = vmatprep.subr.mxu0 0.0
  %v1280 = vand.u32 %v1153, 4294901760
  %v1281 = vsub.f32 %v1153, %v1280
  %v1282 = vand.u32 %v1281, 4294901760
  %v1283 = vsub.f32 %v1281, %v1282
  %v1284 = vand.u32 %v1283, 4294901760
  %1285 = vmatpush1.msra.mxu0 %v1284
  %1286 = vmatprep.subr.mxu0 0.0
  %v1287 = vand.u32 %v1154, 4294901760
  %v1288 = vsub.f32 %v1154, %v1287
  %v1289 = vand.u32 %v1288, 4294901760
  %v1290 = vsub.f32 %v1288, %v1289
  %v1291 = vand.u32 %v1290, 4294901760
  %1292 = vmatpush1.msra.mxu0 %v1291
  %1293 = vmatprep.subr.mxu0 0.0
  %v1294 = vand.u32 %v1155, 4294901760
  %v1295 = vsub.f32 %v1155, %v1294
  %v1296 = vand.u32 %v1295, 4294901760
  %v1297 = vsub.f32 %v1295, %v1296
  %v1298 = vand.u32 %v1297, 4294901760
  %1299 = vmatpush1.msra.mxu0 %v1298
  %1300 = vmatprep.subr.mxu0 0.0
  %v1301 = vand.u32 %v1156, 4294901760
  %v1302 = vsub.f32 %v1156, %v1301
  %v1303 = vand.u32 %v1302, 4294901760
  %v1304 = vsub.f32 %v1302, %v1303
  %v1305 = vand.u32 %v1304, 4294901760
  %1306 = vmatpush1.msra.mxu0 %v1305
  %1307 = vmatprep.subr.mxu0 0.0
  %v1308 = vand.u32 %v1157, 4294901760
  %v1309 = vsub.f32 %v1157, %v1308
  %v1310 = vand.u32 %v1309, 4294901760
  %v1311 = vsub.f32 %v1309, %v1310
  %v1312 = vand.u32 %v1311, 4294901760
  %1313 = vmatpush1.msra.mxu0 %v1312
  %1314 = vmatprep.subr.mxu0 0.0
  %v1315 = vand.u32 %v1158, 4294901760
  %v1316 = vsub.f32 %v1158, %v1315
  %v1317 = vand.u32 %v1316, 4294901760
  %v1318 = vsub.f32 %v1316, %v1317
  %v1319 = vand.u32 %v1318, 4294901760
  %1320 = vmatpush1.msra.mxu0 %v1319
  %1321 = vmatprep.subr.mxu0 0.0
  %v1322 = vand.u32 %v1159, 4294901760
  %v1323 = vsub.f32 %v1159, %v1322
  %v1324 = vand.u32 %v1323, 4294901760
  %v1325 = vsub.f32 %v1323, %v1324
  %v1326 = vand.u32 %v1325, 4294901760
  %1327 = vmatpush1.msra.mxu0 %v1326
  %1328 = vmatprep.subr.mxu0 0.0
  %v1329 = vand.u32 %v1160, 4294901760
  %v1330 = vsub.f32 %v1160, %v1329
  %v1331 = vand.u32 %v1330, 4294901760
  %v1332 = vsub.f32 %v1330, %v1331
  %v1333 = vand.u32 %v1332, 4294901760
  %1334 = vmatpush1.msra.mxu0 %v1333
  %1335 = vmatprep.subr.mxu0 0.0
  %v1336 = vand.u32 %v1161, 4294901760
  %v1337 = vsub.f32 %v1161, %v1336
  %v1338 = vand.u32 %v1337, 4294901760
  %v1339 = vsub.f32 %v1337, %v1338
  %v1340 = vand.u32 %v1339, 4294901760
  %1341 = vmatpush1.msra.mxu0 %v1340
  %1342 = vmatprep.subr.mxu0 0.0
  %v1343 = vand.u32 %v1162, 4294901760
  %v1344 = vsub.f32 %v1162, %v1343
  %v1345 = vand.u32 %v1344, 4294901760
  %v1346 = vsub.f32 %v1344, %v1345
  %v1347 = vand.u32 %v1346, 4294901760
  %1348 = vmatpush1.msra.mxu0 %v1347
  %1349 = vmatprep.subr.mxu0 0.0
  %v1350 = vand.u32 %v1163, 4294901760
  %v1351 = vsub.f32 %v1163, %v1350
  %v1352 = vand.u32 %v1351, 4294901760
  %v1353 = vsub.f32 %v1351, %v1352
  %v1354 = vand.u32 %v1353, 4294901760
  %1355 = vmatpush1.msra.mxu0 %v1354
  %1356 = vmatprep.subr.mxu0 0.0
  %v1357 = vand.u32 %v1164, 4294901760
  %v1358 = vsub.f32 %v1164, %v1357
  %v1359 = vand.u32 %v1358, 4294901760
  %v1360 = vsub.f32 %v1358, %v1359
  %v1361 = vand.u32 %v1360, 4294901760
  %1362 = vmatpush1.msra.mxu0 %v1361
  %1363 = vmatprep.subr.mxu0 0.0
  %v1364 = vand.u32 %v1165, 4294901760
  %v1365 = vsub.f32 %v1165, %v1364
  %v1366 = vand.u32 %v1365, 4294901760
  %v1367 = vsub.f32 %v1365, %v1366
  %v1368 = vand.u32 %v1367, 4294901760
  %1369 = vmatpush1.msra.mxu0 %v1368
  %1370 = vmatprep.subr.mxu0 0.0
  %v1371 = vand.u32 %v1166, 4294901760
  %v1372 = vsub.f32 %v1166, %v1371
  %v1373 = vand.u32 %v1372, 4294901760
  %v1374 = vsub.f32 %v1372, %v1373
  %v1375 = vand.u32 %v1374, 4294901760
  %1376 = vmatpush1.msra.mxu0 %v1375
  %1377 = vmatprep.subr.mxu0 0.0
  %1378 = vmatpush1.msra.mxu0 0.0
  %1379 = vmatprep.subr.mxu0 0.0
  %1380 = vmatpush1.msra.mxu0 0.0
  %1381 = vmatprep.subr.mxu0 0.0
  %1382 = vmatpush1.msra.mxu0 0.0
  %1383 = vmatprep.subr.mxu0 0.0
  %1384 = vmatpush1.msra.mxu0 0.0
  %1385 = vmatprep.subr.mxu0 0.0
  %1386 = vmatpush1.msra.mxu0 0.0
  %1387 = vmatprep.subr.mxu0 0.0
  %1388 = vmatpush1.msra.mxu0 0.0
  %1389 = vmatprep.subr.mxu0 0.0
  %1390 = vmatpush1.msra.mxu0 0.0
  %1391 = vmatprep.subr.mxu0 0.0
  %1392 = vmatpush1.msra.mxu0 0.0
  %1393 = vmatprep.subr.mxu0 0.0
  %1394 = vmatpush1.msra.mxu0 0.0
  %1395 = vmatprep.subr.mxu0 0.0
  %1396 = vmatpush1.msra.mxu0 0.0
  %1397 = vmatprep.subr.mxu0 0.0
  %1398 = vmatpush1.msra.mxu0 0.0
  %1399 = vmatprep.subr.mxu0 0.0
  %1400 = vmatpush1.msra.mxu0 0.0
  %1401 = vmatprep.subr.mxu0 0.0
  %1402 = vmatpush1.msra.mxu0 0.0
  %1403 = vmatprep.subr.mxu0 0.0
  %1404 = vmatpush1.msra.mxu0 0.0
  %1405 = vmatprep.subr.mxu0 0.0
  %1406 = vmatpush1.msra.mxu0 0.0
  %1407 = vmatprep.subr.mxu0 0.0
  %1408 = vmatpush1.msra.mxu0 0.0
  %1409 = vmatprep.mubr.f32.mxu0 0.0
  %v1410 = vand.u32 %v1150, 4294901760
  %1411 = vmatmul.mubr.f32.gmra.mrb[0].mxu0 %v1410
  %v1412 = vpop.f32.mrb[0].mxu0
  %v1413 = vadd.f32 %v1262, %v1412
  %v1414 = vpop.f32.mrb[0].mxu0
  %1415 = vdwg.mxu0
  %1416 = vmatprep.subr.mxu0 0.0
  %v1417 = vand.u32 %v1151, 4294901760
  %v1418 = vsub.f32 %v1151, %v1417
  %1419 = vmatpush1.msra.mxu0 %v1418
  %1420 = vmatprep.subr.mxu0 0.0
  %v1421 = vand.u32 %v1152, 4294901760
  %v1422 = vsub.f32 %v1152, %v1421
  %1423 = vmatpush1.msra.mxu0 %v1422
  %1424 = vmatprep.subr.mxu0 0.0
  %v1425 = vand.u32 %v1153, 4294901760
  %v1426 = vsub.f32 %v1153, %v1425
  %1427 = vmatpush1.msra.mxu0 %v1426
  %1428 = vmatprep.subr.mxu0 0.0
  %v1429 = vand.u32 %v1154, 4294901760
  %v1430 = vsub.f32 %v1154, %v1429
  %1431 = vmatpush1.msra.mxu0 %v1430
  %1432 = vmatprep.subr.mxu0 0.0
  %v1433 = vand.u32 %v1155, 4294901760
  %v1434 = vsub.f32 %v1155, %v1433
  %1435 = vmatpush1.msra.mxu0 %v1434
  %1436 = vmatprep.subr.mxu0 0.0
  %v1437 = vand.u32 %v1156, 4294901760
  %v1438 = vsub.f32 %v1156, %v1437
  %1439 = vmatpush1.msra.mxu0 %v1438
  %1440 = vmatprep.subr.mxu0 0.0
  %v1441 = vand.u32 %v1157, 4294901760
  %v1442 = vsub.f32 %v1157, %v1441
  %1443 = vmatpush1.msra.mxu0 %v1442
  %1444 = vmatprep.subr.mxu0 0.0
  %v1445 = vand.u32 %v1158, 4294901760
  %v1446 = vsub.f32 %v1158, %v1445
  %1447 = vmatpush1.msra.mxu0 %v1446
  %1448 = vmatprep.subr.mxu0 0.0
  %v1449 = vand.u32 %v1159, 4294901760
  %v1450 = vsub.f32 %v1159, %v1449
  %1451 = vmatpush1.msra.mxu0 %v1450
  %1452 = vmatprep.subr.mxu0 0.0
  %v1453 = vand.u32 %v1160, 4294901760
  %v1454 = vsub.f32 %v1160, %v1453
  %1455 = vmatpush1.msra.mxu0 %v1454
  %1456 = vmatprep.subr.mxu0 0.0
  %v1457 = vand.u32 %v1161, 4294901760
  %v1458 = vsub.f32 %v1161, %v1457
  %1459 = vmatpush1.msra.mxu0 %v1458
  %1460 = vmatprep.subr.mxu0 0.0
  %v1461 = vand.u32 %v1162, 4294901760
  %v1462 = vsub.f32 %v1162, %v1461
  %1463 = vmatpush1.msra.mxu0 %v1462
  %1464 = vmatprep.subr.mxu0 0.0
  %v1465 = vand.u32 %v1163, 4294901760
  %v1466 = vsub.f32 %v1163, %v1465
  %1467 = vmatpush1.msra.mxu0 %v1466
  %1468 = vmatprep.subr.mxu0 0.0
  %v1469 = vand.u32 %v1164, 4294901760
  %v1470 = vsub.f32 %v1164, %v1469
  %1471 = vmatpush1.msra.mxu0 %v1470
  %1472 = vmatprep.subr.mxu0 0.0
  %v1473 = vand.u32 %v1165, 4294901760
  %v1474 = vsub.f32 %v1165, %v1473
  %1475 = vmatpush1.msra.mxu0 %v1474
  %1476 = vmatprep.subr.mxu0 0.0
  %v1477 = vand.u32 %v1166, 4294901760
  %v1478 = vsub.f32 %v1166, %v1477
  %1479 = vmatpush1.msra.mxu0 %v1478
  %1480 = vmatprep.subr.mxu0 0.0
  %1481 = vmatpush1.msra.mxu0 0.0
  %1482 = vmatprep.subr.mxu0 0.0
  %1483 = vmatpush1.msra.mxu0 0.0
  %1484 = vmatprep.subr.mxu0 0.0
  %1485 = vmatpush1.msra.mxu0 0.0
  %1486 = vmatprep.subr.mxu0 0.0
  %1487 = vmatpush1.msra.mxu0 0.0
  %1488 = vmatprep.subr.mxu0 0.0
  %1489 = vmatpush1.msra.mxu0 0.0
  %1490 = vmatprep.subr.mxu0 0.0
  %1491 = vmatpush1.msra.mxu0 0.0
  %1492 = vmatprep.subr.mxu0 0.0
  %1493 = vmatpush1.msra.mxu0 0.0
  %1494 = vmatprep.subr.mxu0 0.0
  %1495 = vmatpush1.msra.mxu0 0.0
  %1496 = vmatprep.subr.mxu0 0.0
  %1497 = vmatpush1.msra.mxu0 0.0
  %1498 = vmatprep.subr.mxu0 0.0
  %1499 = vmatpush1.msra.mxu0 0.0
  %1500 = vmatprep.subr.mxu0 0.0
  %1501 = vmatpush1.msra.mxu0 0.0
  %1502 = vmatprep.subr.mxu0 0.0
  %1503 = vmatpush1.msra.mxu0 0.0
  %1504 = vmatprep.subr.mxu0 0.0
  %1505 = vmatpush1.msra.mxu0 0.0
  %1506 = vmatprep.subr.mxu0 0.0
  %1507 = vmatpush1.msra.mxu0 0.0
  %1508 = vmatprep.subr.mxu0 0.0
  %1509 = vmatpush1.msra.mxu0 0.0
  %1510 = vmatprep.subr.mxu0 0.0
  %1511 = vmatpush1.msra.mxu0 0.0
  %1512 = vmatprep.mubr.f32.mxu0 0.0
  %v1513 = vand.u32 %v1150, 4294901760
  %v1514 = vsub.f32 %v1150, %v1513
  %1515 = vmatmul.mubr.f32.gmra.mrb[0].mxu0 %v1514
  %v1516 = vpop.f32.mrb[0].mxu0
  %v1517 = vadd.f32 %v1413, %v1516
  %v1518 = vpop.f32.mrb[0].mxu0
  %1519 = vdwg.mxu0
  %1520 = vmatprep.subr.mxu0 0.0
  %v1521 = vand.u32 %v1151, 4294901760
  %1522 = vmatpush1.msra.mxu0 %v1521
  %1523 = vmatprep.subr.mxu0 0.0
  %v1524 = vand.u32 %v1152, 4294901760
  %1525 = vmatpush1.msra.mxu0 %v1524
  %1526 = vmatprep.subr.mxu0 0.0
  %v1527 = vand.u32 %v1153, 4294901760
  %1528 = vmatpush1.msra.mxu0 %v1527
  %1529 = vmatprep.subr.mxu0 0.0
  %v1530 = vand.u32 %v1154, 4294901760
  %1531 = vmatpush1.msra.mxu0 %v1530
  %1532 = vmatprep.subr.mxu0 0.0
  %v1533 = vand.u32 %v1155, 4294901760
  %1534 = vmatpush1.msra.mxu0 %v1533
  %1535 = vmatprep.subr.mxu0 0.0
  %v1536 = vand.u32 %v1156, 4294901760
  %1537 = vmatpush1.msra.mxu0 %v1536
  %1538 = vmatprep.subr.mxu0 0.0
  %v1539 = vand.u32 %v1157, 4294901760
  %1540 = vmatpush1.msra.mxu0 %v1539
  %1541 = vmatprep.subr.mxu0 0.0
  %v1542 = vand.u32 %v1158, 4294901760
  %1543 = vmatpush1.msra.mxu0 %v1542
  %1544 = vmatprep.subr.mxu0 0.0
  %v1545 = vand.u32 %v1159, 4294901760
  %1546 = vmatpush1.msra.mxu0 %v1545
  %1547 = vmatprep.subr.mxu0 0.0
  %v1548 = vand.u32 %v1160, 4294901760
  %1549 = vmatpush1.msra.mxu0 %v1548
  %1550 = vmatprep.subr.mxu0 0.0
  %v1551 = vand.u32 %v1161, 4294901760
  %1552 = vmatpush1.msra.mxu0 %v1551
  %1553 = vmatprep.subr.mxu0 0.0
  %v1554 = vand.u32 %v1162, 4294901760
  %1555 = vmatpush1.msra.mxu0 %v1554
  %1556 = vmatprep.subr.mxu0 0.0
  %v1557 = vand.u32 %v1163, 4294901760
  %1558 = vmatpush1.msra.mxu0 %v1557
  %1559 = vmatprep.subr.mxu0 0.0
  %v1560 = vand.u32 %v1164, 4294901760
  %1561 = vmatpush1.msra.mxu0 %v1560
  %1562 = vmatprep.subr.mxu0 0.0
  %v1563 = vand.u32 %v1165, 4294901760
  %1564 = vmatpush1.msra.mxu0 %v1563
  %1565 = vmatprep.subr.mxu0 0.0
  %v1566 = vand.u32 %v1166, 4294901760
  %1567 = vmatpush1.msra.mxu0 %v1566
  %1568 = vmatprep.subr.mxu0 0.0
  %1569 = vmatpush1.msra.mxu0 0.0
  %1570 = vmatprep.subr.mxu0 0.0
  %1571 = vmatpush1.msra.mxu0 0.0
  %1572 = vmatprep.subr.mxu0 0.0
  %1573 = vmatpush1.msra.mxu0 0.0
  %1574 = vmatprep.subr.mxu0 0.0
  %1575 = vmatpush1.msra.mxu0 0.0
  %1576 = vmatprep.subr.mxu0 0.0
  %1577 = vmatpush1.msra.mxu0 0.0
  %1578 = vmatprep.subr.mxu0 0.0
  %1579 = vmatpush1.msra.mxu0 0.0
  %1580 = vmatprep.subr.mxu0 0.0
  %1581 = vmatpush1.msra.mxu0 0.0
  %1582 = vmatprep.subr.mxu0 0.0
  %1583 = vmatpush1.msra.mxu0 0.0
  %1584 = vmatprep.subr.mxu0 0.0
  %1585 = vmatpush1.msra.mxu0 0.0
  %1586 = vmatprep.subr.mxu0 0.0
  %1587 = vmatpush1.msra.mxu0 0.0
  %1588 = vmatprep.subr.mxu0 0.0
  %1589 = vmatpush1.msra.mxu0 0.0
  %1590 = vmatprep.subr.mxu0 0.0
  %1591 = vmatpush1.msra.mxu0 0.0
  %1592 = vmatprep.subr.mxu0 0.0
  %1593 = vmatpush1.msra.mxu0 0.0
  %1594 = vmatprep.subr.mxu0 0.0
  %1595 = vmatpush1.msra.mxu0 0.0
  %1596 = vmatprep.subr.mxu0 0.0
  %1597 = vmatpush1.msra.mxu0 0.0
  %1598 = vmatprep.subr.mxu0 0.0
  %1599 = vmatpush1.msra.mxu0 0.0
  %1600 = vmatprep.mubr.f32.mxu0 0.0
  %v1601 = vand.u32 %v1150, 4294901760
  %v1602 = vsub.f32 %v1150, %v1601
  %v1603 = vand.u32 %v1602, 4294901760
  %1604 = vmatmul.mubr.f32.gmra.mrb[0].mxu0 %v1603
  %v1605 = vpop.f32.mrb[0].mxu0
  %v1606 = vadd.f32 %v1517, %v1605
  %v1607 = vpop.f32.mrb[0].mxu0
  %1608 = vdwg.mxu0
  %1609 = vmatprep.subr.mxu0 0.0
  %v1610 = vand.u32 %v1151, 4294901760
  %v1611 = vsub.f32 %v1151, %v1610
  %v1612 = vand.u32 %v1611, 4294901760
  %1613 = vmatpush1.msra.mxu0 %v1612
  %1614 = vmatprep.subr.mxu0 0.0
  %v1615 = vand.u32 %v1152, 4294901760
  %v1616 = vsub.f32 %v1152, %v1615
  %v1617 = vand.u32 %v1616, 4294901760
  %1618 = vmatpush1.msra.mxu0 %v1617
  %1619 = vmatprep.subr.mxu0 0.0
  %v1620 = vand.u32 %v1153, 4294901760
  %v1621 = vsub.f32 %v1153, %v1620
  %v1622 = vand.u32 %v1621, 4294901760
  %1623 = vmatpush1.msra.mxu0 %v1622
  %1624 = vmatprep.subr.mxu0 0.0
  %v1625 = vand.u32 %v1154, 4294901760
  %v1626 = vsub.f32 %v1154, %v1625
  %v1627 = vand.u32 %v1626, 4294901760
  %1628 = vmatpush1.msra.mxu0 %v1627
  %1629 = vmatprep.subr.mxu0 0.0
  %v1630 = vand.u32 %v1155, 4294901760
  %v1631 = vsub.f32 %v1155, %v1630
  %v1632 = vand.u32 %v1631, 4294901760
  %1633 = vmatpush1.msra.mxu0 %v1632
  %1634 = vmatprep.subr.mxu0 0.0
  %v1635 = vand.u32 %v1156, 4294901760
  %v1636 = vsub.f32 %v1156, %v1635
  %v1637 = vand.u32 %v1636, 4294901760
  %1638 = vmatpush1.msra.mxu0 %v1637
  %1639 = vmatprep.subr.mxu0 0.0
  %v1640 = vand.u32 %v1157, 4294901760
  %v1641 = vsub.f32 %v1157, %v1640
  %v1642 = vand.u32 %v1641, 4294901760
  %1643 = vmatpush1.msra.mxu0 %v1642
  %1644 = vmatprep.subr.mxu0 0.0
  %v1645 = vand.u32 %v1158, 4294901760
  %v1646 = vsub.f32 %v1158, %v1645
  %v1647 = vand.u32 %v1646, 4294901760
  %1648 = vmatpush1.msra.mxu0 %v1647
  %1649 = vmatprep.subr.mxu0 0.0
  %v1650 = vand.u32 %v1159, 4294901760
  %v1651 = vsub.f32 %v1159, %v1650
  %v1652 = vand.u32 %v1651, 4294901760
  %1653 = vmatpush1.msra.mxu0 %v1652
  %1654 = vmatprep.subr.mxu0 0.0
  %v1655 = vand.u32 %v1160, 4294901760
  %v1656 = vsub.f32 %v1160, %v1655
  %v1657 = vand.u32 %v1656, 4294901760
  %1658 = vmatpush1.msra.mxu0 %v1657
  %1659 = vmatprep.subr.mxu0 0.0
  %v1660 = vand.u32 %v1161, 4294901760
  %v1661 = vsub.f32 %v1161, %v1660
  %v1662 = vand.u32 %v1661, 4294901760
  %1663 = vmatpush1.msra.mxu0 %v1662
  %1664 = vmatprep.subr.mxu0 0.0
  %v1665 = vand.u32 %v1162, 4294901760
  %v1666 = vsub.f32 %v1162, %v1665
  %v1667 = vand.u32 %v1666, 4294901760
  %1668 = vmatpush1.msra.mxu0 %v1667
  %1669 = vmatprep.subr.mxu0 0.0
  %v1670 = vand.u32 %v1163, 4294901760
  %v1671 = vsub.f32 %v1163, %v1670
  %v1672 = vand.u32 %v1671, 4294901760
  %1673 = vmatpush1.msra.mxu0 %v1672
  %1674 = vmatprep.subr.mxu0 0.0
  %v1675 = vand.u32 %v1164, 4294901760
  %v1676 = vsub.f32 %v1164, %v1675
  %v1677 = vand.u32 %v1676, 4294901760
  %1678 = vmatpush1.msra.mxu0 %v1677
  %1679 = vmatprep.subr.mxu0 0.0
  %v1680 = vand.u32 %v1165, 4294901760
  %v1681 = vsub.f32 %v1165, %v1680
  %v1682 = vand.u32 %v1681, 4294901760
  %1683 = vmatpush1.msra.mxu0 %v1682
  %1684 = vmatprep.subr.mxu0 0.0
  %v1685 = vand.u32 %v1166, 4294901760
  %v1686 = vsub.f32 %v1166, %v1685
  %v1687 = vand.u32 %v1686, 4294901760
  %1688 = vmatpush1.msra.mxu0 %v1687
  %1689 = vmatprep.subr.mxu0 0.0
  %1690 = vmatpush1.msra.mxu0 0.0
  %1691 = vmatprep.subr.mxu0 0.0
  %1692 = vmatpush1.msra.mxu0 0.0
  %1693 = vmatprep.subr.mxu0 0.0
  %1694 = vmatpush1.msra.mxu0 0.0
  %1695 = vmatprep.subr.mxu0 0.0
  %1696 = vmatpush1.msra.mxu0 0.0
  %1697 = vmatprep.subr.mxu0 0.0
  %1698 = vmatpush1.msra.mxu0 0.0
  %1699 = vmatprep.subr.mxu0 0.0
  %1700 = vmatpush1.msra.mxu0 0.0
  %1701 = vmatprep.subr.mxu0 0.0
  %1702 = vmatpush1.msra.mxu0 0.0
  %1703 = vmatprep.subr.mxu0 0.0
  %1704 = vmatpush1.msra.mxu0 0.0
  %1705 = vmatprep.subr.mxu0 0.0
  %1706 = vmatpush1.msra.mxu0 0.0
  %1707 = vmatprep.subr.mxu0 0.0
  %1708 = vmatpush1.msra.mxu0 0.0
  %1709 = vmatprep.subr.mxu0 0.0
  %1710 = vmatpush1.msra.mxu0 0.0
  %1711 = vmatprep.subr.mxu0 0.0
  %1712 = vmatpush1.msra.mxu0 0.0
  %1713 = vmatprep.subr.mxu0 0.0
  %1714 = vmatpush1.msra.mxu0 0.0
  %1715 = vmatprep.subr.mxu0 0.0
  %1716 = vmatpush1.msra.mxu0 0.0
  %1717 = vmatprep.subr.mxu0 0.0
  %1718 = vmatpush1.msra.mxu0 0.0
  %1719 = vmatprep.subr.mxu0 0.0
  %1720 = vmatpush1.msra.mxu0 0.0
  %1721 = vmatprep.mubr.f32.mxu0 0.0
  %v1722 = vand.u32 %v1150, 4294901760
  %1723 = vmatmul.mubr.f32.gmra.mrb[0].mxu0 %v1722
  %v1724 = vpop.f32.mrb[0].mxu0
  %v1725 = vadd.f32 %v1606, %v1724
  %v1726 = vpop.f32.mrb[0].mxu0
  %1727 = vdwg.mxu0
  %1728 = vmatprep.subr.mxu0 0.0
  %v1729 = vand.u32 %v1151, 4294901760
  %1730 = vmatpush1.msra.mxu0 %v1729
  %1731 = vmatprep.subr.mxu0 0.0
  %v1732 = vand.u32 %v1152, 4294901760
  %1733 = vmatpush1.msra.mxu0 %v1732
  %1734 = vmatprep.subr.mxu0 0.0
  %v1735 = vand.u32 %v1153, 4294901760
  %1736 = vmatpush1.msra.mxu0 %v1735
  %1737 = vmatprep.subr.mxu0 0.0
  %v1738 = vand.u32 %v1154, 4294901760
  %1739 = vmatpush1.msra.mxu0 %v1738
  %1740 = vmatprep.subr.mxu0 0.0
  %v1741 = vand.u32 %v1155, 4294901760
  %1742 = vmatpush1.msra.mxu0 %v1741
  %1743 = vmatprep.subr.mxu0 0.0
  %v1744 = vand.u32 %v1156, 4294901760
  %1745 = vmatpush1.msra.mxu0 %v1744
  %1746 = vmatprep.subr.mxu0 0.0
  %v1747 = vand.u32 %v1157, 4294901760
  %1748 = vmatpush1.msra.mxu0 %v1747
  %1749 = vmatprep.subr.mxu0 0.0
  %v1750 = vand.u32 %v1158, 4294901760
  %1751 = vmatpush1.msra.mxu0 %v1750
  %1752 = vmatprep.subr.mxu0 0.0
  %v1753 = vand.u32 %v1159, 4294901760
  %1754 = vmatpush1.msra.mxu0 %v1753
  %1755 = vmatprep.subr.mxu0 0.0
  %v1756 = vand.u32 %v1160, 4294901760
  %1757 = vmatpush1.msra.mxu0 %v1756
  %1758 = vmatprep.subr.mxu0 0.0
  %v1759 = vand.u32 %v1161, 4294901760
  %1760 = vmatpush1.msra.mxu0 %v1759
  %1761 = vmatprep.subr.mxu0 0.0
  %v1762 = vand.u32 %v1162, 4294901760
  %1763 = vmatpush1.msra.mxu0 %v1762
  %1764 = vmatprep.subr.mxu0 0.0
  %v1765 = vand.u32 %v1163, 4294901760
  %1766 = vmatpush1.msra.mxu0 %v1765
  %1767 = vmatprep.subr.mxu0 0.0
  %v1768 = vand.u32 %v1164, 4294901760
  %1769 = vmatpush1.msra.mxu0 %v1768
  %1770 = vmatprep.subr.mxu0 0.0
  %v1771 = vand.u32 %v1165, 4294901760
  %1772 = vmatpush1.msra.mxu0 %v1771
  %1773 = vmatprep.subr.mxu0 0.0
  %v1774 = vand.u32 %v1166, 4294901760
  %1775 = vmatpush1.msra.mxu0 %v1774
  %1776 = vmatprep.subr.mxu0 0.0
  %1777 = vmatpush1.msra.mxu0 0.0
  %1778 = vmatprep.subr.mxu0 0.0
  %1779 = vmatpush1.msra.mxu0 0.0
  %1780 = vmatprep.subr.mxu0 0.0
  %1781 = vmatpush1.msra.mxu0 0.0
  %1782 = vmatprep.subr.mxu0 0.0
  %1783 = vmatpush1.msra.mxu0 0.0
  %1784 = vmatprep.subr.mxu0 0.0
  %1785 = vmatpush1.msra.mxu0 0.0
  %1786 = vmatprep.subr.mxu0 0.0
  %1787 = vmatpush1.msra.mxu0 0.0
  %1788 = vmatprep.subr.mxu0 0.0
  %1789 = vmatpush1.msra.mxu0 0.0
  %1790 = vmatprep.subr.mxu0 0.0
  %1791 = vmatpush1.msra.mxu0 0.0
  %1792 = vmatprep.subr.mxu0 0.0
  %1793 = vmatpush1.msra.mxu0 0.0
  %1794 = vmatprep.subr.mxu0 0.0
  %1795 = vmatpush1.msra.mxu0 0.0
  %1796 = vmatprep.subr.mxu0 0.0
  %1797 = vmatpush1.msra.mxu0 0.0
  %1798 = vmatprep.subr.mxu0 0.0
  %1799 = vmatpush1.msra.mxu0 0.0
  %1800 = vmatprep.subr.mxu0 0.0
  %1801 = vmatpush1.msra.mxu0 0.0
  %1802 = vmatprep.subr.mxu0 0.0
  %1803 = vmatpush1.msra.mxu0 0.0
  %1804 = vmatprep.subr.mxu0 0.0
  %1805 = vmatpush1.msra.mxu0 0.0
  %1806 = vmatprep.subr.mxu0 0.0
  %1807 = vmatpush1.msra.mxu0 0.0
  %1808 = vmatprep.mubr.f32.mxu0 0.0
  %v1809 = vand.u32 %v1150, 4294901760
  %1810 = vmatmul.mubr.f32.gmra.mrb[0].mxu0 %v1809
  %v1811 = vpop.f32.mrb[0].mxu0
  %v1812 = vadd.f32 %v1725, %v1811
  %v1813 = vpop.f32.mrb[0].mxu0
  %1814 = vdwg.mxu0
  %vm1815 = vcmask 31744
  %1816 = vst.msk [vmem:[%s7] sm:$0xff] %vm1815, %v1812
  // Predicated region
  $region30: #{qnetwork_forward.1} parent=0 // pred_check
    _
  $region31: #{qnetwork_forward.1} parent=0 // pred_check_branch
    %1818 = sbr.rel (0) target = $region33
  $region32: #{qnetwork_forward.1} parent=0 // pred_region
    _
  $region33: #{qnetwork_forward.1} parent=0 // pred_fallthru
    _
  // Predicated region
  $region34: #{qnetwork_forward.1} parent=0 // pred_check
    _
  $region35: #{qnetwork_forward.1} parent=0 // pred_check_branch
    %1820 = sbr.rel (0) target = $region37
  $region36: #{qnetwork_forward.1} parent=0 // pred_region
    _
  $region37: #{qnetwork_forward.1} parent=0 // pred_fallthru
    _

</llo_original>
